<compile_context>
chip_gen: v7x
topology: tpu7x:2x2x1
jax: 0.10.0
libtpu: 0.0.40
codegen_flags: <defaults>
</compile_context>

<pallas_src>
import functools

import jax
import jax.numpy as jnp
from jax.experimental import pallas as pl
from jax.experimental.pallas import tpu as pltpu

_VMEM = pl.BlockSpec(memory_space=pltpu.MemorySpace.VMEM)


# -----------------------------------------------------------------------------
# Parameter-slab layouts (shared by pack_params and the kernel; pure Python ints)
# -----------------------------------------------------------------------------

def _align8(n):
    return (n + 7) // 8 * 8


def slab_a_layout(two_i, two_r):
    """Row offsets inside slab A (lane width 8R): w_in1 (2I rows), u1 (2R), b_in1 (1)."""
    o_w_in1 = 0
    o_u1 = _align8(o_w_in1 + two_i)
    o_b_in1 = _align8(o_u1 + two_r)
    rows = _align8(o_b_in1 + 1)
    return {"w_in1": o_w_in1, "u1": o_u1, "b_in1": o_b_in1, "rows": rows}


def slab_b_layout(i2, r, feat_in):
    """Row offsets inside slab B (lane width >= 4R): lstm2, map, and FC parameters."""
    o = 0
    off = {}
    for name, nrows in (("w_in2", i2), ("u2", r), ("b_in2", 1),
                        ("w_map", 4 * r), ("b_map", 1),
                        ("fc0_w", feat_in), ("fc0_b", 1),
                        ("fc1_w", 1), ("fc1_b", 1)):
        off[name] = o
        o = _align8(o + nrows)
    off["rows"] = o
    return off


# -----------------------------------------------------------------------------
# Fused kernel: whole Network forward
# -----------------------------------------------------------------------------

def fused_network_kernel(x_ref, x3_ref, x2_ref, a_ref, b_ref, out_ref,
                         xg1_ref, xg2_ref, *, max_x3_len):
    T, B, two_i = x_ref.shape            # x rows hold [x[t] | x[T-1-t]]
    L, _, I2 = x3_ref.shape
    E = x2_ref.shape[1]
    R = a_ref.shape[1] // 8
    f32 = jnp.float32

    la = slab_a_layout(two_i, 2 * R)
    lb = slab_b_layout(I2, R, 3 * R + E)

    # ---- lstm1: hoisted, bias-folded input projection (fwd|bwd interleaved per
    #      gate; bwd half already time-reversed via the concatenated x input) ----
    w_in1 = a_ref[la["w_in1"]:la["w_in1"] + two_i, :]            # (2I, 8R) block-diag
    b_in1 = a_ref[la["b_in1"]:la["b_in1"] + 1, :]                # (1, 8R)
    x_flat = x_ref[...].reshape(T * B, two_i)
    xg1_ref[...] = jnp.dot(x_flat, w_in1, preferred_element_type=f32) + b_in1

    # ---- lstm1 recurrence.  Gate columns: [i_f i_b | f_f f_b | o_f o_b | g_f g_b];
    #      h, c carried as (B, 2R) = [fwd | bwd].  Step t = 0 peeled (h == 0). ----
    u1 = a_ref[la["u1"]:la["u1"] + 2 * R, :]                     # (2R, 8R)
    g = xg1_ref[0:B, :]
    s = jax.nn.sigmoid(g[:, :6 * R])
    gg = jnp.tanh(g[:, 6 * R:])
    c = s[:, :2 * R] * gg                                        # f*0 + i*g
    h = s[:, 4 * R:6 * R] * jnp.tanh(c)
    hb_last = h[:, R:]                  # bwd hidden aligned with time index T-1
    for t in range(1, T):               # static unroll (T small)
        g = jnp.dot(h, u1, preferred_element_type=f32) + xg1_ref[t * B:(t + 1) * B, :]
        s = jax.nn.sigmoid(g[:, :6 * R])
        gg = jnp.tanh(g[:, 6 * R:])
        c = s[:, 2 * R:4 * R] * c + s[:, :2 * R] * gg
        h = s[:, 4 * R:6 * R] * jnp.tanh(c)
    hf_last = h[:, :R]                  # fwd hidden at time index T-1

    # ---- map_h / map_c fused into one block-diagonal matmul + tanh ----
    w_map = b_ref[lb["w_map"]:lb["w_map"] + 4 * R, :]            # (4R, NB), cols 0..2R-1 live
    b_map = b_ref[lb["b_map"]:lb["b_map"] + 1, :]
    hc = jnp.concatenate([h, c], axis=1)                         # (B, 4R) = [hf|hb|cf|cb]
    mapped = jnp.tanh(jnp.dot(hc, w_map, preferred_element_type=f32) + b_map)
    h2 = mapped[:, :R]
    c2 = mapped[:, R:2 * R]

    # ---- lstm2 input projection (deferred: keeps its result pop off the MRF head
    #      of the serial lstm1 recurrence on v5e/v6e) ----
    w_in2 = b_ref[lb["w_in2"]:lb["w_in2"] + I2, :]               # (I2, NB)
    b_in2 = b_ref[lb["b_in2"]:lb["b_in2"] + 1, :]
    x3_flat = x3_ref[...].reshape(L * B, I2)
    xg2_ref[...] = jnp.dot(x3_flat, w_in2, preferred_element_type=f32) + b_in2

    # ---- lstm2 + gather at t == trunc(x2[:,1] * max_x3_len), clamped to [0, L-1] ----
    u2 = b_ref[lb["u2"]:lb["u2"] + R, :]                         # (R, NB)
    x2 = x2_ref[...]
    seq_idx = (x2[:, 1:2] * float(max_x3_len)).astype(jnp.int32)
    seq_idx = jnp.clip(seq_idx, 0, L - 1)
    h_sel = jnp.zeros((B, R), f32)
    for t in range(L):                   # static unroll (L small)
        g4 = jnp.dot(h2, u2, preferred_element_type=f32) + xg2_ref[t * B:(t + 1) * B, :]
        s = jax.nn.sigmoid(g4[:, :3 * R])                        # [i | f | o]
        gg = jnp.tanh(g4[:, 3 * R:4 * R])
        c2 = s[:, R:2 * R] * c2 + s[:, :R] * gg
        h2 = s[:, 2 * R:3 * R] * jnp.tanh(c2)
        h_sel = jnp.where(seq_idx == t, h2, h_sel)

    # ---- feats + FC head: Linear -> ReLU -> (dropout = id) -> Linear(., 1) ----
    feat_in = 3 * R + E
    fc0_w = b_ref[lb["fc0_w"]:lb["fc0_w"] + feat_in, :]          # (3R+E, NB), cols >= fc are 0
    fc0_b = b_ref[lb["fc0_b"]:lb["fc0_b"] + 1, :]
    fc1_w = b_ref[lb["fc1_w"]:lb["fc1_w"] + 1, :]
    fc1_b = b_ref[lb["fc1_b"]:lb["fc1_b"] + 1, 0:1]
    feats = jnp.concatenate([hf_last, hb_last, h_sel, x2], axis=1)   # (B, 3R+E)
    hidden = jnp.maximum(
        jnp.dot(feats, fc0_w, preferred_element_type=f32) + fc0_b, 0.0)
    # (fc, 1) matmul replaced by elementwise mul + lane reduction
    out_ref[...] = jnp.sum(hidden * fc1_w, axis=1, keepdims=True) + fc1_b


# -----------------------------------------------------------------------------
# Forward wrapper (pad / transpose / time-reverse concat / final slice only)
# -----------------------------------------------------------------------------

@functools.partial(jax.jit, static_argnames=("bs", "max_x3_len"))
def network_forward(slab_a, slab_b, x, x2, x3, *, bs, max_x3_len):
    samples = x.shape[0]
    if samples < bs:
        pad = bs - samples
        x = jnp.pad(x, ((0, pad), (0, 0), (0, 0)))
        x2 = jnp.pad(x2, ((0, pad), (0, 0)))
        x3 = jnp.pad(x3, ((0, pad), (0, 0), (0, 0)))

    x_tm = jnp.transpose(x, (1, 0, 2))                   # (T, B, I)
    x_cat = jnp.concatenate([x_tm, x_tm[::-1]], axis=-1) # (T, B, 2I): [x[t] | x[T-1-t]]
    x3_tm = jnp.transpose(x3, (1, 0, 2))                 # (L, B, I-1)

    T, B, _ = x_cat.shape
    L = x3_tm.shape[0]
    R = slab_a.shape[1] // 8
    NB = slab_b.shape[1]

    kernel = functools.partial(fused_network_kernel, max_x3_len=max_x3_len)
    out = pl.pallas_call(
        kernel,
        out_shape=jax.ShapeDtypeStruct((B, 1), jnp.float32),
        in_specs=[_VMEM] * 5,
        out_specs=_VMEM,
        scratch_shapes=[pltpu.VMEM((T * B, 8 * R), jnp.float32),   # xg1
                        pltpu.VMEM((L * B, NB), jnp.float32)],     # xg2
    )(x_cat, x3_tm, x2, slab_a, slab_b)
    return out[:samples, :]


# -----------------------------------------------------------------------------
# PyTorch-layout parameter init + packing into the two kernel slabs
# -----------------------------------------------------------------------------

def init_torch_params(key, input_vars, ex_vars, r_units, fc_units):
    """Random params in PyTorch's native layouts (LSTM gate order [i, f, g, o])."""
    def u(k, shape, fan):
        s = 1.0 / float(fan) ** 0.5
        return jax.random.uniform(k, shape, jnp.float32, -s, s)

    R, I = r_units, input_vars
    ks = iter(jax.random.split(key, 24))
    p = {}
    for d in ("f", "b"):                       # lstm1 forward / reverse
        p[f"lstm1_w_ih_{d}"] = u(next(ks), (4 * R, I), R)
        p[f"lstm1_w_hh_{d}"] = u(next(ks), (4 * R, R), R)
        p[f"lstm1_b_ih_{d}"] = u(next(ks), (4 * R,), R)
        p[f"lstm1_b_hh_{d}"] = u(next(ks), (4 * R,), R)
    p["maph_w"] = u(next(ks), (R, 2 * R), 2 * R)
    p["maph_b"] = u(next(ks), (R,), 2 * R)
    p["mapc_w"] = u(next(ks), (R, 2 * R), 2 * R)
    p["mapc_b"] = u(next(ks), (R,), 2 * R)
    p["lstm2_w_ih"] = u(next(ks), (4 * R, I - 1), R)
    p["lstm2_w_hh"] = u(next(ks), (4 * R, R), R)
    p["lstm2_b_ih"] = u(next(ks), (4 * R,), R)
    p["lstm2_b_hh"] = u(next(ks), (4 * R,), R)
    fin = 3 * R + ex_vars                      # unrestricted, num_fc_layers = 2
    p["fc0_w"] = u(next(ks), (fc_units, fin), fin)
    p["fc0_b"] = u(next(ks), (fc_units,), fin)
    p["fc1_w"] = u(next(ks), (1, fc_units), fc_units)
    p["fc1_b"] = u(next(ks), (1,), fc_units)
    return p


def pack_params(p, r_units):
    """Repack PyTorch-layout params into the two (8,128)-aligned kernel slabs."""
    R = r_units
    f32 = jnp.float32
    I = p["lstm1_w_ih_f"].shape[1]
    feat_in = p["fc0_w"].shape[1]
    fc_units = p["fc0_w"].shape[0]
    order = (0, 1, 3, 2)   # torch gate blocks [i, f, g, o] -> kernel order [i, f, o, g]

    def gate_blocks(w):    # leading-axis (4R, ...) or (4R,) -> 4 blocks in kernel order
        return [w[k * R:(k + 1) * R] for k in order]

    # ---- lstm1: per-gate fwd/bwd interleaved columns, block-diag over [x | x_rev] ----
    gi_f = gate_blocks(p["lstm1_w_ih_f"])      # each (R, I)
    gi_b = gate_blocks(p["lstm1_w_ih_b"])
    zI = jnp.zeros((I, R), f32)
    w_in1 = jnp.concatenate(
        [jnp.concatenate([jnp.concatenate([g.T, zI], axis=1) for g in gi_f], axis=1),
         jnp.concatenate([jnp.concatenate([zI, g.T], axis=1) for g in gi_b], axis=1)],
        axis=0)                                                  # (2I, 8R)

    gh_f = gate_blocks(p["lstm1_w_hh_f"])      # each (R, R)
    gh_b = gate_blocks(p["lstm1_w_hh_b"])
    zR = jnp.zeros((R, R), f32)
    u1 = jnp.concatenate(
        [jnp.concatenate([jnp.concatenate([g.T, zR], axis=1) for g in gh_f], axis=1),
         jnp.concatenate([jnp.concatenate([zR, g.T], axis=1) for g in gh_b], axis=1)],
        axis=0)                                                  # (2R, 8R)

    b1f = gate_blocks(p["lstm1_b_ih_f"] + p["lstm1_b_hh_f"])     # each (R,)
    b1b = gate_blocks(p["lstm1_b_ih_b"] + p["lstm1_b_hh_b"])
    b_in1 = jnp.concatenate(
        [jnp.concatenate([bf, bb]) for bf, bb in zip(b1f, b1b)]).reshape(1, 8 * R)

    # ---- lstm2 (gate order [i, f, o, g]) ----
    w_in2 = jnp.concatenate([g.T for g in gate_blocks(p["lstm2_w_ih"])], axis=1)  # (I-1, 4R)
    u2 = jnp.concatenate([g.T for g in gate_blocks(p["lstm2_w_hh"])], axis=1)     # (R, 4R)
    b_in2 = jnp.concatenate(
        gate_blocks(p["lstm2_b_ih"] + p["lstm2_b_hh"])).reshape(1, 4 * R)

    # ---- map_h / map_c block-diagonal ----
    z2R = jnp.zeros((2 * R, R), f32)
    w_map = jnp.concatenate(
        [jnp.concatenate([p["maph_w"].T, z2R], axis=1),
         jnp.concatenate([z2R, p["mapc_w"].T], axis=1)], axis=0)                  # (4R, 2R)
    b_map = jnp.concatenate([p["maph_b"], p["mapc_b"]]).reshape(1, 2 * R)

    # ---- FC head ----
    fc0_w = p["fc0_w"].T                       # (3R+E, fc)
    fc0_b = p["fc0_b"].reshape(1, -1)
    fc1_w = p["fc1_w"].reshape(1, -1)
    fc1_b = p["fc1_b"].reshape(1, 1)

    # ---- slab A (lane width 8R) ----
    la = slab_a_layout(2 * I, 2 * R)
    slab_a = jnp.zeros((la["rows"], 8 * R), f32)
    slab_a = slab_a.at[la["w_in1"]:la["w_in1"] + 2 * I].set(w_in1)
    slab_a = slab_a.at[la["u1"]:la["u1"] + 2 * R].set(u1)
    slab_a = slab_a.at[la["b_in1"]:la["b_in1"] + 1].set(b_in1)

    # ---- slab B (lane width NB >= 4R, zero-padded columns) ----
    NB = max(4 * R, fc_units)
    lb = slab_b_layout(I - 1, R, feat_in)
    slab_b = jnp.zeros((lb["rows"], NB), f32)

    def put(slab, off, arr):
        r, c = arr.shape
        return slab.at[off:off + r, :c].set(arr)

    slab_b = put(slab_b, lb["w_in2"], w_in2)
    slab_b = put(slab_b, lb["u2"], u2)
    slab_b = put(slab_b, lb["b_in2"], b_in2)
    slab_b = put(slab_b, lb["w_map"], w_map)
    slab_b = put(slab_b, lb["b_map"], b_map)
    slab_b = put(slab_b, lb["fc0_w"], fc0_w)
    slab_b = put(slab_b, lb["fc0_b"], fc0_b)
    slab_b = put(slab_b, lb["fc1_w"], fc1_w)
    slab_b = put(slab_b, lb["fc1_b"], fc1_b)
    return slab_a, slab_b


# -----------------------------------------------------------------------------
# Pure-JAX reference (mirrors the PyTorch module, eval mode, zero initial state)
# -----------------------------------------------------------------------------

def reference_forward(p, x, x2, x3, *, bs, max_x3_len, r_units):
    R = r_units
    hi = jax.lax.Precision.HIGHEST
    samples = x.shape[0]
    if samples < bs:
        pad = bs - samples
        x = jnp.pad(x, ((0, pad), (0, 0), (0, 0)))
        x2 = jnp.pad(x2, ((0, pad), (0, 0)))
        x3 = jnp.pad(x3, ((0, pad), (0, 0), (0, 0)))
    B, T, _ = x.shape
    L = x3.shape[1]

    def cell(x_t, h, c, wih, whh, bih, bhh):
        z = (jnp.dot(x_t, wih.T, precision=hi) + bih
             + jnp.dot(h, whh.T, precision=hi) + bhh)
        i = jax.nn.sigmoid(z[:, :R])
        f = jax.nn.sigmoid(z[:, R:2 * R])
        g = jnp.tanh(z[:, 2 * R:3 * R])
        o = jax.nn.sigmoid(z[:, 3 * R:4 * R])
        c = f * c + i * g
        return o * jnp.tanh(c), c

    hf = jnp.zeros((B, R), jnp.float32); cf = jnp.zeros((B, R), jnp.float32)
    hb = jnp.zeros((B, R), jnp.float32); cb = jnp.zeros((B, R), jnp.float32)
    out_f = []
    for t in range(T):
        hf, cf = cell(x[:, t], hf, cf, p["lstm1_w_ih_f"], p["lstm1_w_hh_f"],
                      p["lstm1_b_ih_f"], p["lstm1_b_hh_f"])
        out_f.append(hf)
    out_b = [None] * T
    for t in reversed(range(T)):
        hb, cb = cell(x[:, t], hb, cb, p["lstm1_w_ih_b"], p["lstm1_w_hh_b"],
                      p["lstm1_b_ih_b"], p["lstm1_b_hh_b"])
        out_b[t] = hb
    lstm1_last = jnp.concatenate([out_f[-1], out_b[-1]], axis=1)

    h2 = jnp.tanh(jnp.dot(jnp.concatenate([hf, hb], axis=1), p["maph_w"].T,
                          precision=hi) + p["maph_b"])
    c2 = jnp.tanh(jnp.dot(jnp.concatenate([cf, cb], axis=1), p["mapc_w"].T,
                          precision=hi) + p["mapc_b"])

    seq_idx = jnp.clip((x2[:, 1] * max_x3_len).astype(jnp.int32), 0, L - 1)
    h_sel = jnp.zeros((B, R), jnp.float32)
    for t in range(L):
        h2, c2 = cell(x3[:, t], h2, c2, p["lstm2_w_ih"], p["lstm2_w_hh"],
                      p["lstm2_b_ih"], p["lstm2_b_hh"])
        h_sel = jnp.where((seq_idx == t)[:, None], h2, h_sel)

    feats = jnp.concatenate([lstm1_last, h_sel, x2], axis=1)
    hidden = jax.nn.relu(jnp.dot(feats, p["fc0_w"].T, precision=hi) + p["fc0_b"])
    out = jnp.dot(hidden, p["fc1_w"].T, precision=hi) + p["fc1_b"]
    return out[:samples, :]


# -----------------------------------------------------------------------------
# Main
# -----------------------------------------------------------------------------

if __name__ == "__main__":
    input_vars = 5
    ex_vars = 3
    r_units = 32
    fc_units = 32
    bs = 8
    seq_len = 8
    max_x3_len = 6
    samples = 6  # < bs: exercises the pad-then-slice path

    key = jax.random.PRNGKey(0)
    kparam_key, kx, kx2, kx3 = jax.random.split(key, 4)

    torch_params = init_torch_params(kparam_key, input_vars, ex_vars, r_units, fc_units)
    slab_a, slab_b = pack_params(torch_params, r_units)

    x = jax.random.normal(kx, (samples, seq_len, input_vars), jnp.float32)
    # x2[:, 1] in [0, 1) so the lstm2 gather index lies in [0, max_x3_len)
    x2 = jax.random.uniform(kx2, (samples, ex_vars), jnp.float32)
    x3 = jax.random.normal(kx3, (samples, max_x3_len, input_vars - 1), jnp.float32)

    out = network_forward(slab_a, slab_b, x, x2, x3, bs=bs, max_x3_len=max_x3_len)
    out = jax.block_until_ready(out)

    ref = reference_forward(torch_params, x, x2, x3, bs=bs, max_x3_len=max_x3_len,
                            r_units=r_units)
    ref = jax.block_until_ready(ref)

    assert out.shape == (samples, 1), out.shape
    assert bool(jnp.all(jnp.isfinite(out)))
    err = float(jnp.max(jnp.abs(out - ref)))
    assert err < 1e-2, f"max abs err vs reference = {err}"
    print("KERNEL_OK")
</pallas_src>

<mosaic_0001>
module attributes {stable_mosaic.version = 11 : i64} {
  func.func @fused_network_kernel(%arg0: memref<8x8x10xf32, #tpu.memory_space<vmem>>, %arg1: memref<6x8x4xf32, #tpu.memory_space<vmem>>, %arg2: memref<8x3xf32, #tpu.memory_space<vmem>>, %arg3: memref<88x256xf32, #tpu.memory_space<vmem>>, %arg4: memref<312x128xf32, #tpu.memory_space<vmem>>, %arg5: memref<8x1xf32, #tpu.memory_space<vmem>>, %arg6: memref<64x256xf32, #tpu.memory_space<vmem>>, %arg7: memref<48x128xf32, #tpu.memory_space<vmem>>) attributes {dimension_semantics = [], scalar_prefetch = 0 : i64, scratch_operands = 2 : i64, tpu.core_type = #tpu.core_type<tc>} {
    %c0 = arith.constant 0 : index
    %c0_0 = arith.constant 0 : index
    %0 = vector.load %arg3[%c0, %c0_0] : memref<88x256xf32, #tpu.memory_space<vmem>>, vector<10x256xf32>
    %c80 = arith.constant 80 : index
    %c0_1 = arith.constant 0 : index
    %1 = vector.load %arg3[%c80, %c0_1] : memref<88x256xf32, #tpu.memory_space<vmem>>, vector<1x256xf32>
    %c0_2 = arith.constant 0 : index
    %c0_3 = arith.constant 0 : index
    %c0_4 = arith.constant 0 : index
    %2 = vector.load %arg0[%c0_2, %c0_3, %c0_4] : memref<8x8x10xf32, #tpu.memory_space<vmem>>, vector<8x8x10xf32>
    %3 = vector.shape_cast %2 : vector<8x8x10xf32> to vector<64x10xf32>
    %cst = arith.constant dense<0.000000e+00> : vector<64x256xf32>
    %4 = tpu.matmul %3, %0, %cst {dimension_numbers = #tpu.dot_dimension_numbers<[1], [0], [0], [1], [0, 0, 1, 1], [], []>} : vector<64x10xf32>, vector<10x256xf32>, vector<64x256xf32> -> vector<64x256xf32>
    %5 = vector.broadcast %1 : vector<1x256xf32> to vector<64x256xf32>
    %6 = arith.addf %4, %5 : vector<64x256xf32>
    %c0_5 = arith.constant 0 : index
    %c0_6 = arith.constant 0 : index
    %7 = vector.load %arg6[%c0_5, %c0_6] : memref<64x256xf32, #tpu.memory_space<vmem>>, vector<64x256xf32>
    tpu.vector_store %arg6[%c0_5, %c0_6], %6 {strides = array<i32>} : memref<64x256xf32, #tpu.memory_space<vmem>>, vector<64x256xf32>,
    %c16 = arith.constant 16 : index
    %c0_7 = arith.constant 0 : index
    %8 = vector.load %arg3[%c16, %c0_7] : memref<88x256xf32, #tpu.memory_space<vmem>>, vector<64x256xf32>
    %c0_8 = arith.constant 0 : index
    %c0_9 = arith.constant 0 : index
    %9 = vector.load %arg6[%c0_8, %c0_9] : memref<64x256xf32, #tpu.memory_space<vmem>>, vector<8x256xf32>
    %10 = vector.extract_strided_slice %9 {offsets = [0, 0], sizes = [8, 192], strides = [1, 1]} : vector<8x256xf32> to vector<8x192xf32>
    %11 = arith.negf %10 : vector<8x192xf32>
    %12 = math.exp %11 : vector<8x192xf32>
    %cst_10 = arith.constant 1.000000e+00 : f32
    %13 = vector.broadcast %cst_10 : f32 to vector<8x192xf32>
    %14 = arith.addf %13, %12 : vector<8x192xf32>
    %15 = arith.divf %13, %14 : vector<8x192xf32>
    %16 = vector.extract_strided_slice %9 {offsets = [0, 192], sizes = [8, 64], strides = [1, 1]} : vector<8x256xf32> to vector<8x64xf32>
    %17 = math.tanh %16 : vector<8x64xf32>
    %18 = vector.extract_strided_slice %15 {offsets = [0, 0], sizes = [8, 64], strides = [1, 1]} : vector<8x192xf32> to vector<8x64xf32>
    %19 = arith.mulf %18, %17 : vector<8x64xf32>
    %20 = vector.extract_strided_slice %15 {offsets = [0, 128], sizes = [8, 64], strides = [1, 1]} : vector<8x192xf32> to vector<8x64xf32>
    %21 = math.tanh %19 : vector<8x64xf32>
    %22 = arith.mulf %20, %21 : vector<8x64xf32>
    %23 = vector.extract_strided_slice %22 {offsets = [0, 32], sizes = [8, 32], strides = [1, 1]} : vector<8x64xf32> to vector<8x32xf32>
    %cst_11 = arith.constant dense<0.000000e+00> : vector<8x256xf32>
    %24 = tpu.matmul %22, %8, %cst_11 {dimension_numbers = #tpu.dot_dimension_numbers<[1], [0], [0], [1], [0, 0, 1, 1], [], []>} : vector<8x64xf32>, vector<64x256xf32>, vector<8x256xf32> -> vector<8x256xf32>
    %c8 = arith.constant 8 : index
    %c0_12 = arith.constant 0 : index
    %25 = vector.load %arg6[%c8, %c0_12] : memref<64x256xf32, #tpu.memory_space<vmem>>, vector<8x256xf32>
    %26 = arith.addf %24, %25 : vector<8x256xf32>
    %27 = vector.extract_strided_slice %26 {offsets = [0, 0], sizes = [8, 192], strides = [1, 1]} : vector<8x256xf32> to vector<8x192xf32>
    %28 = arith.negf %27 : vector<8x192xf32>
    %29 = math.exp %28 : vector<8x192xf32>
    %cst_13 = arith.constant 1.000000e+00 : f32
    %30 = vector.broadcast %cst_13 : f32 to vector<8x192xf32>
    %31 = arith.addf %30, %29 : vector<8x192xf32>
    %32 = arith.divf %30, %31 : vector<8x192xf32>
    %33 = vector.extract_strided_slice %26 {offsets = [0, 192], sizes = [8, 64], strides = [1, 1]} : vector<8x256xf32> to vector<8x64xf32>
    %34 = math.tanh %33 : vector<8x64xf32>
    %35 = vector.extract_strided_slice %32 {offsets = [0, 64], sizes = [8, 64], strides = [1, 1]} : vector<8x192xf32> to vector<8x64xf32>
    %36 = arith.mulf %35, %19 : vector<8x64xf32>
    %37 = vector.extract_strided_slice %32 {offsets = [0, 0], sizes = [8, 64], strides = [1, 1]} : vector<8x192xf32> to vector<8x64xf32>
    %38 = arith.mulf %37, %34 : vector<8x64xf32>
    %39 = arith.addf %36, %38 : vector<8x64xf32>
    %40 = vector.extract_strided_slice %32 {offsets = [0, 128], sizes = [8, 64], strides = [1, 1]} : vector<8x192xf32> to vector<8x64xf32>
    %41 = math.tanh %39 : vector<8x64xf32>
    %42 = arith.mulf %40, %41 : vector<8x64xf32>
    %cst_14 = arith.constant dense<0.000000e+00> : vector<8x256xf32>
    %43 = tpu.matmul %42, %8, %cst_14 {dimension_numbers = #tpu.dot_dimension_numbers<[1], [0], [0], [1], [0, 0, 1, 1], [], []>} : vector<8x64xf32>, vector<64x256xf32>, vector<8x256xf32> -> vector<8x256xf32>
    %c16_15 = arith.constant 16 : index
    %c0_16 = arith.constant 0 : index
    %44 = vector.load %arg6[%c16_15, %c0_16] : memref<64x256xf32, #tpu.memory_space<vmem>>, vector<8x256xf32>
    %45 = arith.addf %43, %44 : vector<8x256xf32>
    %46 = vector.extract_strided_slice %45 {offsets = [0, 0], sizes = [8, 192], strides = [1, 1]} : vector<8x256xf32> to vector<8x192xf32>
    %47 = arith.negf %46 : vector<8x192xf32>
    %48 = math.exp %47 : vector<8x192xf32>
    %cst_17 = arith.constant 1.000000e+00 : f32
    %49 = vector.broadcast %cst_17 : f32 to vector<8x192xf32>
    %50 = arith.addf %49, %48 : vector<8x192xf32>
    %51 = arith.divf %49, %50 : vector<8x192xf32>
    %52 = vector.extract_strided_slice %45 {offsets = [0, 192], sizes = [8, 64], strides = [1, 1]} : vector<8x256xf32> to vector<8x64xf32>
    %53 = math.tanh %52 : vector<8x64xf32>
    %54 = vector.extract_strided_slice %51 {offsets = [0, 64], sizes = [8, 64], strides = [1, 1]} : vector<8x192xf32> to vector<8x64xf32>
    %55 = arith.mulf %54, %39 : vector<8x64xf32>
    %56 = vector.extract_strided_slice %51 {offsets = [0, 0], sizes = [8, 64], strides = [1, 1]} : vector<8x192xf32> to vector<8x64xf32>
    %57 = arith.mulf %56, %53 : vector<8x64xf32>
    %58 = arith.addf %55, %57 : vector<8x64xf32>
    %59 = vector.extract_strided_slice %51 {offsets = [0, 128], sizes = [8, 64], strides = [1, 1]} : vector<8x192xf32> to vector<8x64xf32>
    %60 = math.tanh %58 : vector<8x64xf32>
    %61 = arith.mulf %59, %60 : vector<8x64xf32>
    %cst_18 = arith.constant dense<0.000000e+00> : vector<8x256xf32>
    %62 = tpu.matmul %61, %8, %cst_18 {dimension_numbers = #tpu.dot_dimension_numbers<[1], [0], [0], [1], [0, 0, 1, 1], [], []>} : vector<8x64xf32>, vector<64x256xf32>, vector<8x256xf32> -> vector<8x256xf32>
    %c24 = arith.constant 24 : index
    %c0_19 = arith.constant 0 : index
    %63 = vector.load %arg6[%c24, %c0_19] : memref<64x256xf32, #tpu.memory_space<vmem>>, vector<8x256xf32>
    %64 = arith.addf %62, %63 : vector<8x256xf32>
    %65 = vector.extract_strided_slice %64 {offsets = [0, 0], sizes = [8, 192], strides = [1, 1]} : vector<8x256xf32> to vector<8x192xf32>
    %66 = arith.negf %65 : vector<8x192xf32>
    %67 = math.exp %66 : vector<8x192xf32>
    %cst_20 = arith.constant 1.000000e+00 : f32
    %68 = vector.broadcast %cst_20 : f32 to vector<8x192xf32>
    %69 = arith.addf %68, %67 : vector<8x192xf32>
    %70 = arith.divf %68, %69 : vector<8x192xf32>
    %71 = vector.extract_strided_slice %64 {offsets = [0, 192], sizes = [8, 64], strides = [1, 1]} : vector<8x256xf32> to vector<8x64xf32>
    %72 = math.tanh %71 : vector<8x64xf32>
    %73 = vector.extract_strided_slice %70 {offsets = [0, 64], sizes = [8, 64], strides = [1, 1]} : vector<8x192xf32> to vector<8x64xf32>
    %74 = arith.mulf %73, %58 : vector<8x64xf32>
    %75 = vector.extract_strided_slice %70 {offsets = [0, 0], sizes = [8, 64], strides = [1, 1]} : vector<8x192xf32> to vector<8x64xf32>
    %76 = arith.mulf %75, %72 : vector<8x64xf32>
    %77 = arith.addf %74, %76 : vector<8x64xf32>
    %78 = vector.extract_strided_slice %70 {offsets = [0, 128], sizes = [8, 64], strides = [1, 1]} : vector<8x192xf32> to vector<8x64xf32>
    %79 = math.tanh %77 : vector<8x64xf32>
    %80 = arith.mulf %78, %79 : vector<8x64xf32>
    %cst_21 = arith.constant dense<0.000000e+00> : vector<8x256xf32>
    %81 = tpu.matmul %80, %8, %cst_21 {dimension_numbers = #tpu.dot_dimension_numbers<[1], [0], [0], [1], [0, 0, 1, 1], [], []>} : vector<8x64xf32>, vector<64x256xf32>, vector<8x256xf32> -> vector<8x256xf32>
    %c32 = arith.constant 32 : index
    %c0_22 = arith.constant 0 : index
    %82 = vector.load %arg6[%c32, %c0_22] : memref<64x256xf32, #tpu.memory_space<vmem>>, vector<8x256xf32>
    %83 = arith.addf %81, %82 : vector<8x256xf32>
    %84 = vector.extract_strided_slice %83 {offsets = [0, 0], sizes = [8, 192], strides = [1, 1]} : vector<8x256xf32> to vector<8x192xf32>
    %85 = arith.negf %84 : vector<8x192xf32>
    %86 = math.exp %85 : vector<8x192xf32>
    %cst_23 = arith.constant 1.000000e+00 : f32
    %87 = vector.broadcast %cst_23 : f32 to vector<8x192xf32>
    %88 = arith.addf %87, %86 : vector<8x192xf32>
    %89 = arith.divf %87, %88 : vector<8x192xf32>
    %90 = vector.extract_strided_slice %83 {offsets = [0, 192], sizes = [8, 64], strides = [1, 1]} : vector<8x256xf32> to vector<8x64xf32>
    %91 = math.tanh %90 : vector<8x64xf32>
    %92 = vector.extract_strided_slice %89 {offsets = [0, 64], sizes = [8, 64], strides = [1, 1]} : vector<8x192xf32> to vector<8x64xf32>
    %93 = arith.mulf %92, %77 : vector<8x64xf32>
    %94 = vector.extract_strided_slice %89 {offsets = [0, 0], sizes = [8, 64], strides = [1, 1]} : vector<8x192xf32> to vector<8x64xf32>
    %95 = arith.mulf %94, %91 : vector<8x64xf32>
    %96 = arith.addf %93, %95 : vector<8x64xf32>
    %97 = vector.extract_strided_slice %89 {offsets = [0, 128], sizes = [8, 64], strides = [1, 1]} : vector<8x192xf32> to vector<8x64xf32>
    %98 = math.tanh %96 : vector<8x64xf32>
    %99 = arith.mulf %97, %98 : vector<8x64xf32>
    %cst_24 = arith.constant dense<0.000000e+00> : vector<8x256xf32>
    %100 = tpu.matmul %99, %8, %cst_24 {dimension_numbers = #tpu.dot_dimension_numbers<[1], [0], [0], [1], [0, 0, 1, 1], [], []>} : vector<8x64xf32>, vector<64x256xf32>, vector<8x256xf32> -> vector<8x256xf32>
    %c40 = arith.constant 40 : index
    %c0_25 = arith.constant 0 : index
    %101 = vector.load %arg6[%c40, %c0_25] : memref<64x256xf32, #tpu.memory_space<vmem>>, vector<8x256xf32>
    %102 = arith.addf %100, %101 : vector<8x256xf32>
    %103 = vector.extract_strided_slice %102 {offsets = [0, 0], sizes = [8, 192], strides = [1, 1]} : vector<8x256xf32> to vector<8x192xf32>
    %104 = arith.negf %103 : vector<8x192xf32>
    %105 = math.exp %104 : vector<8x192xf32>
    %cst_26 = arith.constant 1.000000e+00 : f32
    %106 = vector.broadcast %cst_26 : f32 to vector<8x192xf32>
    %107 = arith.addf %106, %105 : vector<8x192xf32>
    %108 = arith.divf %106, %107 : vector<8x192xf32>
    %109 = vector.extract_strided_slice %102 {offsets = [0, 192], sizes = [8, 64], strides = [1, 1]} : vector<8x256xf32> to vector<8x64xf32>
    %110 = math.tanh %109 : vector<8x64xf32>
    %111 = vector.extract_strided_slice %108 {offsets = [0, 64], sizes = [8, 64], strides = [1, 1]} : vector<8x192xf32> to vector<8x64xf32>
    %112 = arith.mulf %111, %96 : vector<8x64xf32>
    %113 = vector.extract_strided_slice %108 {offsets = [0, 0], sizes = [8, 64], strides = [1, 1]} : vector<8x192xf32> to vector<8x64xf32>
    %114 = arith.mulf %113, %110 : vector<8x64xf32>
    %115 = arith.addf %112, %114 : vector<8x64xf32>
    %116 = vector.extract_strided_slice %108 {offsets = [0, 128], sizes = [8, 64], strides = [1, 1]} : vector<8x192xf32> to vector<8x64xf32>
    %117 = math.tanh %115 : vector<8x64xf32>
    %118 = arith.mulf %116, %117 : vector<8x64xf32>
    %cst_27 = arith.constant dense<0.000000e+00> : vector<8x256xf32>
    %119 = tpu.matmul %118, %8, %cst_27 {dimension_numbers = #tpu.dot_dimension_numbers<[1], [0], [0], [1], [0, 0, 1, 1], [], []>} : vector<8x64xf32>, vector<64x256xf32>, vector<8x256xf32> -> vector<8x256xf32>
    %c48 = arith.constant 48 : index
    %c0_28 = arith.constant 0 : index
    %120 = vector.load %arg6[%c48, %c0_28] : memref<64x256xf32, #tpu.memory_space<vmem>>, vector<8x256xf32>
    %121 = arith.addf %119, %120 : vector<8x256xf32>
    %122 = vector.extract_strided_slice %121 {offsets = [0, 0], sizes = [8, 192], strides = [1, 1]} : vector<8x256xf32> to vector<8x192xf32>
    %123 = arith.negf %122 : vector<8x192xf32>
    %124 = math.exp %123 : vector<8x192xf32>
    %cst_29 = arith.constant 1.000000e+00 : f32
    %125 = vector.broadcast %cst_29 : f32 to vector<8x192xf32>
    %126 = arith.addf %125, %124 : vector<8x192xf32>
    %127 = arith.divf %125, %126 : vector<8x192xf32>
    %128 = vector.extract_strided_slice %121 {offsets = [0, 192], sizes = [8, 64], strides = [1, 1]} : vector<8x256xf32> to vector<8x64xf32>
    %129 = math.tanh %128 : vector<8x64xf32>
    %130 = vector.extract_strided_slice %127 {offsets = [0, 64], sizes = [8, 64], strides = [1, 1]} : vector<8x192xf32> to vector<8x64xf32>
    %131 = arith.mulf %130, %115 : vector<8x64xf32>
    %132 = vector.extract_strided_slice %127 {offsets = [0, 0], sizes = [8, 64], strides = [1, 1]} : vector<8x192xf32> to vector<8x64xf32>
    %133 = arith.mulf %132, %129 : vector<8x64xf32>
    %134 = arith.addf %131, %133 : vector<8x64xf32>
    %135 = vector.extract_strided_slice %127 {offsets = [0, 128], sizes = [8, 64], strides = [1, 1]} : vector<8x192xf32> to vector<8x64xf32>
    %136 = math.tanh %134 : vector<8x64xf32>
    %137 = arith.mulf %135, %136 : vector<8x64xf32>
    %cst_30 = arith.constant dense<0.000000e+00> : vector<8x256xf32>
    %138 = tpu.matmul %137, %8, %cst_30 {dimension_numbers = #tpu.dot_dimension_numbers<[1], [0], [0], [1], [0, 0, 1, 1], [], []>} : vector<8x64xf32>, vector<64x256xf32>, vector<8x256xf32> -> vector<8x256xf32>
    %c56 = arith.constant 56 : index
    %c0_31 = arith.constant 0 : index
    %139 = vector.load %arg6[%c56, %c0_31] : memref<64x256xf32, #tpu.memory_space<vmem>>, vector<8x256xf32>
    %140 = arith.addf %138, %139 : vector<8x256xf32>
    %141 = vector.extract_strided_slice %140 {offsets = [0, 0], sizes = [8, 192], strides = [1, 1]} : vector<8x256xf32> to vector<8x192xf32>
    %142 = arith.negf %141 : vector<8x192xf32>
    %143 = math.exp %142 : vector<8x192xf32>
    %cst_32 = arith.constant 1.000000e+00 : f32
    %144 = vector.broadcast %cst_32 : f32 to vector<8x192xf32>
    %145 = arith.addf %144, %143 : vector<8x192xf32>
    %146 = arith.divf %144, %145 : vector<8x192xf32>
    %147 = vector.extract_strided_slice %140 {offsets = [0, 192], sizes = [8, 64], strides = [1, 1]} : vector<8x256xf32> to vector<8x64xf32>
    %148 = math.tanh %147 : vector<8x64xf32>
    %149 = vector.extract_strided_slice %146 {offsets = [0, 64], sizes = [8, 64], strides = [1, 1]} : vector<8x192xf32> to vector<8x64xf32>
    %150 = arith.mulf %149, %134 : vector<8x64xf32>
    %151 = vector.extract_strided_slice %146 {offsets = [0, 0], sizes = [8, 64], strides = [1, 1]} : vector<8x192xf32> to vector<8x64xf32>
    %152 = arith.mulf %151, %148 : vector<8x64xf32>
    %153 = arith.addf %150, %152 : vector<8x64xf32>
    %154 = vector.extract_strided_slice %146 {offsets = [0, 128], sizes = [8, 64], strides = [1, 1]} : vector<8x192xf32> to vector<8x64xf32>
    %155 = math.tanh %153 : vector<8x64xf32>
    %156 = arith.mulf %154, %155 : vector<8x64xf32>
    %157 = vector.extract_strided_slice %156 {offsets = [0, 0], sizes = [8, 32], strides = [1, 1]} : vector<8x64xf32> to vector<8x32xf32>
    %c48_33 = arith.constant 48 : index
    %c0_34 = arith.constant 0 : index
    %158 = vector.load %arg4[%c48_33, %c0_34] : memref<312x128xf32, #tpu.memory_space<vmem>>, vector<128x128xf32>
    %c176 = arith.constant 176 : index
    %c0_35 = arith.constant 0 : index
    %159 = vector.load %arg4[%c176, %c0_35] : memref<312x128xf32, #tpu.memory_space<vmem>>, vector<1x128xf32>
    %160 = tpu.concatenate %156, %153 in 1 : vector<8x64xf32>, vector<8x64xf32> -> vector<8x128xf32>
    %cst_36 = arith.constant dense<0.000000e+00> : vector<8x128xf32>
    %161 = tpu.matmul %160, %158, %cst_36 {dimension_numbers = #tpu.dot_dimension_numbers<[1], [0], [0], [1], [0, 0, 1, 1], [], []>} : vector<8x128xf32>, vector<128x128xf32>, vector<8x128xf32> -> vector<8x128xf32>
    %162 = vector.broadcast %159 : vector<1x128xf32> to vector<8x128xf32>
    %163 = arith.addf %161, %162 : vector<8x128xf32>
    %164 = math.tanh %163 : vector<8x128xf32>
    %165 = vector.extract_strided_slice %164 {offsets = [0, 0], sizes = [8, 32], strides = [1, 1]} : vector<8x128xf32> to vector<8x32xf32>
    %166 = vector.extract_strided_slice %164 {offsets = [0, 32], sizes = [8, 32], strides = [1, 1]} : vector<8x128xf32> to vector<8x32xf32>
    %c0_37 = arith.constant 0 : index
    %c0_38 = arith.constant 0 : index
    %167 = vector.load %arg4[%c0_37, %c0_38] : memref<312x128xf32, #tpu.memory_space<vmem>>, vector<4x128xf32>
    %c40_39 = arith.constant 40 : index
    %c0_40 = arith.constant 0 : index
    %168 = vector.load %arg4[%c40_39, %c0_40] : memref<312x128xf32, #tpu.memory_space<vmem>>, vector<1x128xf32>
    %c0_41 = arith.constant 0 : index
    %c0_42 = arith.constant 0 : index
    %c0_43 = arith.constant 0 : index
    %169 = vector.load %arg1[%c0_41, %c0_42, %c0_43] : memref<6x8x4xf32, #tpu.memory_space<vmem>>, vector<6x8x4xf32>
    %170 = vector.shape_cast %169 : vector<6x8x4xf32> to vector<48x4xf32>
    %cst_44 = arith.constant dense<0.000000e+00> : vector<48x128xf32>
    %171 = tpu.matmul %170, %167, %cst_44 {dimension_numbers = #tpu.dot_dimension_numbers<[1], [0], [0], [1], [0, 0, 1, 1], [], []>} : vector<48x4xf32>, vector<4x128xf32>, vector<48x128xf32> -> vector<48x128xf32>
    %172 = vector.broadcast %168 : vector<1x128xf32> to vector<48x128xf32>
    %173 = arith.addf %171, %172 : vector<48x128xf32>
    %c0_45 = arith.constant 0 : index
    %c0_46 = arith.constant 0 : index
    %174 = vector.load %arg7[%c0_45, %c0_46] : memref<48x128xf32, #tpu.memory_space<vmem>>, vector<48x128xf32>
    tpu.vector_store %arg7[%c0_45, %c0_46], %173 {strides = array<i32>} : memref<48x128xf32, #tpu.memory_space<vmem>>, vector<48x128xf32>,
    %c8_47 = arith.constant 8 : index
    %c0_48 = arith.constant 0 : index
    %175 = vector.load %arg4[%c8_47, %c0_48] : memref<312x128xf32, #tpu.memory_space<vmem>>, vector<32x128xf32>
    %c0_49 = arith.constant 0 : index
    %c0_50 = arith.constant 0 : index
    %176 = vector.load %arg2[%c0_49, %c0_50] : memref<8x3xf32, #tpu.memory_space<vmem>>, vector<8x3xf32>
    %177 = vector.extract_strided_slice %176 {offsets = [0, 1], sizes = [8, 1], strides = [1, 1]} : vector<8x3xf32> to vector<8x1xf32>
    %cst_51 = arith.constant 6.000000e+00 : f32
    %178 = vector.broadcast %cst_51 : f32 to vector<8x1xf32>
    %179 = arith.mulf %177, %178 : vector<8x1xf32>
    %180 = arith.fptosi %179 : vector<8x1xf32> to vector<8x1xi32>
    %c0_i32 = arith.constant 0 : i32
    %c5_i32 = arith.constant 5 : i32
    %181 = vector.broadcast %c0_i32 : i32 to vector<8x1xi32>
    %182 = arith.maxsi %181, %180 : vector<8x1xi32>
    %183 = vector.broadcast %c5_i32 : i32 to vector<8x1xi32>
    %184 = arith.minsi %183, %182 : vector<8x1xi32>
    %cst_52 = arith.constant 0.000000e+00 : f32
    %185 = vector.broadcast %cst_52 : f32 to vector<8x32xf32>
    %cst_53 = arith.constant dense<0.000000e+00> : vector<8x128xf32>
    %186 = tpu.matmul %165, %175, %cst_53 {dimension_numbers = #tpu.dot_dimension_numbers<[1], [0], [0], [1], [0, 0, 1, 1], [], []>} : vector<8x32xf32>, vector<32x128xf32>, vector<8x128xf32> -> vector<8x128xf32>
    %c0_54 = arith.constant 0 : index
    %c0_55 = arith.constant 0 : index
    %187 = vector.load %arg7[%c0_54, %c0_55] : memref<48x128xf32, #tpu.memory_space<vmem>>, vector<8x128xf32>
    %188 = arith.addf %186, %187 : vector<8x128xf32>
    %189 = vector.extract_strided_slice %188 {offsets = [0, 0], sizes = [8, 96], strides = [1, 1]} : vector<8x128xf32> to vector<8x96xf32>
    %190 = arith.negf %189 : vector<8x96xf32>
    %191 = math.exp %190 : vector<8x96xf32>
    %cst_56 = arith.constant 1.000000e+00 : f32
    %192 = vector.broadcast %cst_56 : f32 to vector<8x96xf32>
    %193 = arith.addf %192, %191 : vector<8x96xf32>
    %194 = arith.divf %192, %193 : vector<8x96xf32>
    %195 = vector.extract_strided_slice %188 {offsets = [0, 96], sizes = [8, 32], strides = [1, 1]} : vector<8x128xf32> to vector<8x32xf32>
    %196 = math.tanh %195 : vector<8x32xf32>
    %197 = vector.extract_strided_slice %194 {offsets = [0, 32], sizes = [8, 32], strides = [1, 1]} : vector<8x96xf32> to vector<8x32xf32>
    %198 = arith.mulf %197, %166 : vector<8x32xf32>
    %199 = vector.extract_strided_slice %194 {offsets = [0, 0], sizes = [8, 32], strides = [1, 1]} : vector<8x96xf32> to vector<8x32xf32>
    %200 = arith.mulf %199, %196 : vector<8x32xf32>
    %201 = arith.addf %198, %200 : vector<8x32xf32>
    %202 = vector.extract_strided_slice %194 {offsets = [0, 64], sizes = [8, 32], strides = [1, 1]} : vector<8x96xf32> to vector<8x32xf32>
    %203 = math.tanh %201 : vector<8x32xf32>
    %204 = arith.mulf %202, %203 : vector<8x32xf32>
    %c0_i32_57 = arith.constant 0 : i32
    %205 = vector.broadcast %c0_i32_57 : i32 to vector<8x1xi32>
    %206 = arith.cmpi eq, %184, %205 : vector<8x1xi32>
    %207 = vector.shape_cast %206 : vector<8x1xi1> to vector<8x1xi1>
    %208 = vector.broadcast %207 : vector<8x1xi1> to vector<8x32xi1>
    %209 = arith.select %208, %204, %185 : vector<8x32xi1>, vector<8x32xf32>
    %cst_58 = arith.constant dense<0.000000e+00> : vector<8x128xf32>
    %210 = tpu.matmul %204, %175, %cst_58 {dimension_numbers = #tpu.dot_dimension_numbers<[1], [0], [0], [1], [0, 0, 1, 1], [], []>} : vector<8x32xf32>, vector<32x128xf32>, vector<8x128xf32> -> vector<8x128xf32>
    %c8_59 = arith.constant 8 : index
    %c0_60 = arith.constant 0 : index
    %211 = vector.load %arg7[%c8_59, %c0_60] : memref<48x128xf32, #tpu.memory_space<vmem>>, vector<8x128xf32>
    %212 = arith.addf %210, %211 : vector<8x128xf32>
    %213 = vector.extract_strided_slice %212 {offsets = [0, 0], sizes = [8, 96], strides = [1, 1]} : vector<8x128xf32> to vector<8x96xf32>
    %214 = arith.negf %213 : vector<8x96xf32>
    %215 = math.exp %214 : vector<8x96xf32>
    %cst_61 = arith.constant 1.000000e+00 : f32
    %216 = vector.broadcast %cst_61 : f32 to vector<8x96xf32>
    %217 = arith.addf %216, %215 : vector<8x96xf32>
    %218 = arith.divf %216, %217 : vector<8x96xf32>
    %219 = vector.extract_strided_slice %212 {offsets = [0, 96], sizes = [8, 32], strides = [1, 1]} : vector<8x128xf32> to vector<8x32xf32>
    %220 = math.tanh %219 : vector<8x32xf32>
    %221 = vector.extract_strided_slice %218 {offsets = [0, 32], sizes = [8, 32], strides = [1, 1]} : vector<8x96xf32> to vector<8x32xf32>
    %222 = arith.mulf %221, %201 : vector<8x32xf32>
    %223 = vector.extract_strided_slice %218 {offsets = [0, 0], sizes = [8, 32], strides = [1, 1]} : vector<8x96xf32> to vector<8x32xf32>
    %224 = arith.mulf %223, %220 : vector<8x32xf32>
    %225 = arith.addf %222, %224 : vector<8x32xf32>
    %226 = vector.extract_strided_slice %218 {offsets = [0, 64], sizes = [8, 32], strides = [1, 1]} : vector<8x96xf32> to vector<8x32xf32>
    %227 = math.tanh %225 : vector<8x32xf32>
    %228 = arith.mulf %226, %227 : vector<8x32xf32>
    %c1_i32 = arith.constant 1 : i32
    %229 = vector.broadcast %c1_i32 : i32 to vector<8x1xi32>
    %230 = arith.cmpi eq, %184, %229 : vector<8x1xi32>
    %231 = vector.shape_cast %230 : vector<8x1xi1> to vector<8x1xi1>
    %232 = vector.broadcast %231 : vector<8x1xi1> to vector<8x32xi1>
    %233 = arith.select %232, %228, %209 : vector<8x32xi1>, vector<8x32xf32>
    %cst_62 = arith.constant dense<0.000000e+00> : vector<8x128xf32>
    %234 = tpu.matmul %228, %175, %cst_62 {dimension_numbers = #tpu.dot_dimension_numbers<[1], [0], [0], [1], [0, 0, 1, 1], [], []>} : vector<8x32xf32>, vector<32x128xf32>, vector<8x128xf32> -> vector<8x128xf32>
    %c16_63 = arith.constant 16 : index
    %c0_64 = arith.constant 0 : index
    %235 = vector.load %arg7[%c16_63, %c0_64] : memref<48x128xf32, #tpu.memory_space<vmem>>, vector<8x128xf32>
    %236 = arith.addf %234, %235 : vector<8x128xf32>
    %237 = vector.extract_strided_slice %236 {offsets = [0, 0], sizes = [8, 96], strides = [1, 1]} : vector<8x128xf32> to vector<8x96xf32>
    %238 = arith.negf %237 : vector<8x96xf32>
    %239 = math.exp %238 : vector<8x96xf32>
    %cst_65 = arith.constant 1.000000e+00 : f32
    %240 = vector.broadcast %cst_65 : f32 to vector<8x96xf32>
    %241 = arith.addf %240, %239 : vector<8x96xf32>
    %242 = arith.divf %240, %241 : vector<8x96xf32>
    %243 = vector.extract_strided_slice %236 {offsets = [0, 96], sizes = [8, 32], strides = [1, 1]} : vector<8x128xf32> to vector<8x32xf32>
    %244 = math.tanh %243 : vector<8x32xf32>
    %245 = vector.extract_strided_slice %242 {offsets = [0, 32], sizes = [8, 32], strides = [1, 1]} : vector<8x96xf32> to vector<8x32xf32>
    %246 = arith.mulf %245, %225 : vector<8x32xf32>
    %247 = vector.extract_strided_slice %242 {offsets = [0, 0], sizes = [8, 32], strides = [1, 1]} : vector<8x96xf32> to vector<8x32xf32>
    %248 = arith.mulf %247, %244 : vector<8x32xf32>
    %249 = arith.addf %246, %248 : vector<8x32xf32>
    %250 = vector.extract_strided_slice %242 {offsets = [0, 64], sizes = [8, 32], strides = [1, 1]} : vector<8x96xf32> to vector<8x32xf32>
    %251 = math.tanh %249 : vector<8x32xf32>
    %252 = arith.mulf %250, %251 : vector<8x32xf32>
    %c2_i32 = arith.constant 2 : i32
    %253 = vector.broadcast %c2_i32 : i32 to vector<8x1xi32>
    %254 = arith.cmpi eq, %184, %253 : vector<8x1xi32>
    %255 = vector.shape_cast %254 : vector<8x1xi1> to vector<8x1xi1>
    %256 = vector.broadcast %255 : vector<8x1xi1> to vector<8x32xi1>
    %257 = arith.select %256, %252, %233 : vector<8x32xi1>, vector<8x32xf32>
    %cst_66 = arith.constant dense<0.000000e+00> : vector<8x128xf32>
    %258 = tpu.matmul %252, %175, %cst_66 {dimension_numbers = #tpu.dot_dimension_numbers<[1], [0], [0], [1], [0, 0, 1, 1], [], []>} : vector<8x32xf32>, vector<32x128xf32>, vector<8x128xf32> -> vector<8x128xf32>
    %c24_67 = arith.constant 24 : index
    %c0_68 = arith.constant 0 : index
    %259 = vector.load %arg7[%c24_67, %c0_68] : memref<48x128xf32, #tpu.memory_space<vmem>>, vector<8x128xf32>
    %260 = arith.addf %258, %259 : vector<8x128xf32>
    %261 = vector.extract_strided_slice %260 {offsets = [0, 0], sizes = [8, 96], strides = [1, 1]} : vector<8x128xf32> to vector<8x96xf32>
    %262 = arith.negf %261 : vector<8x96xf32>
    %263 = math.exp %262 : vector<8x96xf32>
    %cst_69 = arith.constant 1.000000e+00 : f32
    %264 = vector.broadcast %cst_69 : f32 to vector<8x96xf32>
    %265 = arith.addf %264, %263 : vector<8x96xf32>
    %266 = arith.divf %264, %265 : vector<8x96xf32>
    %267 = vector.extract_strided_slice %260 {offsets = [0, 96], sizes = [8, 32], strides = [1, 1]} : vector<8x128xf32> to vector<8x32xf32>
    %268 = math.tanh %267 : vector<8x32xf32>
    %269 = vector.extract_strided_slice %266 {offsets = [0, 32], sizes = [8, 32], strides = [1, 1]} : vector<8x96xf32> to vector<8x32xf32>
    %270 = arith.mulf %269, %249 : vector<8x32xf32>
    %271 = vector.extract_strided_slice %266 {offsets = [0, 0], sizes = [8, 32], strides = [1, 1]} : vector<8x96xf32> to vector<8x32xf32>
    %272 = arith.mulf %271, %268 : vector<8x32xf32>
    %273 = arith.addf %270, %272 : vector<8x32xf32>
    %274 = vector.extract_strided_slice %266 {offsets = [0, 64], sizes = [8, 32], strides = [1, 1]} : vector<8x96xf32> to vector<8x32xf32>
    %275 = math.tanh %273 : vector<8x32xf32>
    %276 = arith.mulf %274, %275 : vector<8x32xf32>
    %c3_i32 = arith.constant 3 : i32
    %277 = vector.broadcast %c3_i32 : i32 to vector<8x1xi32>
    %278 = arith.cmpi eq, %184, %277 : vector<8x1xi32>
    %279 = vector.shape_cast %278 : vector<8x1xi1> to vector<8x1xi1>
    %280 = vector.broadcast %279 : vector<8x1xi1> to vector<8x32xi1>
    %281 = arith.select %280, %276, %257 : vector<8x32xi1>, vector<8x32xf32>
    %cst_70 = arith.constant dense<0.000000e+00> : vector<8x128xf32>
    %282 = tpu.matmul %276, %175, %cst_70 {dimension_numbers = #tpu.dot_dimension_numbers<[1], [0], [0], [1], [0, 0, 1, 1], [], []>} : vector<8x32xf32>, vector<32x128xf32>, vector<8x128xf32> -> vector<8x128xf32>
    %c32_71 = arith.constant 32 : index
    %c0_72 = arith.constant 0 : index
    %283 = vector.load %arg7[%c32_71, %c0_72] : memref<48x128xf32, #tpu.memory_space<vmem>>, vector<8x128xf32>
    %284 = arith.addf %282, %283 : vector<8x128xf32>
    %285 = vector.extract_strided_slice %284 {offsets = [0, 0], sizes = [8, 96], strides = [1, 1]} : vector<8x128xf32> to vector<8x96xf32>
    %286 = arith.negf %285 : vector<8x96xf32>
    %287 = math.exp %286 : vector<8x96xf32>
    %cst_73 = arith.constant 1.000000e+00 : f32
    %288 = vector.broadcast %cst_73 : f32 to vector<8x96xf32>
    %289 = arith.addf %288, %287 : vector<8x96xf32>
    %290 = arith.divf %288, %289 : vector<8x96xf32>
    %291 = vector.extract_strided_slice %284 {offsets = [0, 96], sizes = [8, 32], strides = [1, 1]} : vector<8x128xf32> to vector<8x32xf32>
    %292 = math.tanh %291 : vector<8x32xf32>
    %293 = vector.extract_strided_slice %290 {offsets = [0, 32], sizes = [8, 32], strides = [1, 1]} : vector<8x96xf32> to vector<8x32xf32>
    %294 = arith.mulf %293, %273 : vector<8x32xf32>
    %295 = vector.extract_strided_slice %290 {offsets = [0, 0], sizes = [8, 32], strides = [1, 1]} : vector<8x96xf32> to vector<8x32xf32>
    %296 = arith.mulf %295, %292 : vector<8x32xf32>
    %297 = arith.addf %294, %296 : vector<8x32xf32>
    %298 = vector.extract_strided_slice %290 {offsets = [0, 64], sizes = [8, 32], strides = [1, 1]} : vector<8x96xf32> to vector<8x32xf32>
    %299 = math.tanh %297 : vector<8x32xf32>
    %300 = arith.mulf %298, %299 : vector<8x32xf32>
    %c4_i32 = arith.constant 4 : i32
    %301 = vector.broadcast %c4_i32 : i32 to vector<8x1xi32>
    %302 = arith.cmpi eq, %184, %301 : vector<8x1xi32>
    %303 = vector.shape_cast %302 : vector<8x1xi1> to vector<8x1xi1>
    %304 = vector.broadcast %303 : vector<8x1xi1> to vector<8x32xi1>
    %305 = arith.select %304, %300, %281 : vector<8x32xi1>, vector<8x32xf32>
    %cst_74 = arith.constant dense<0.000000e+00> : vector<8x128xf32>
    %306 = tpu.matmul %300, %175, %cst_74 {dimension_numbers = #tpu.dot_dimension_numbers<[1], [0], [0], [1], [0, 0, 1, 1], [], []>} : vector<8x32xf32>, vector<32x128xf32>, vector<8x128xf32> -> vector<8x128xf32>
    %c40_75 = arith.constant 40 : index
    %c0_76 = arith.constant 0 : index
    %307 = vector.load %arg7[%c40_75, %c0_76] : memref<48x128xf32, #tpu.memory_space<vmem>>, vector<8x128xf32>
    %308 = arith.addf %306, %307 : vector<8x128xf32>
    %309 = vector.extract_strided_slice %308 {offsets = [0, 0], sizes = [8, 96], strides = [1, 1]} : vector<8x128xf32> to vector<8x96xf32>
    %310 = arith.negf %309 : vector<8x96xf32>
    %311 = math.exp %310 : vector<8x96xf32>
    %cst_77 = arith.constant 1.000000e+00 : f32
    %312 = vector.broadcast %cst_77 : f32 to vector<8x96xf32>
    %313 = arith.addf %312, %311 : vector<8x96xf32>
    %314 = arith.divf %312, %313 : vector<8x96xf32>
    %315 = vector.extract_strided_slice %308 {offsets = [0, 96], sizes = [8, 32], strides = [1, 1]} : vector<8x128xf32> to vector<8x32xf32>
    %316 = math.tanh %315 : vector<8x32xf32>
    %317 = vector.extract_strided_slice %314 {offsets = [0, 32], sizes = [8, 32], strides = [1, 1]} : vector<8x96xf32> to vector<8x32xf32>
    %318 = arith.mulf %317, %297 : vector<8x32xf32>
    %319 = vector.extract_strided_slice %314 {offsets = [0, 0], sizes = [8, 32], strides = [1, 1]} : vector<8x96xf32> to vector<8x32xf32>
    %320 = arith.mulf %319, %316 : vector<8x32xf32>
    %321 = arith.addf %318, %320 : vector<8x32xf32>
    %322 = vector.extract_strided_slice %314 {offsets = [0, 64], sizes = [8, 32], strides = [1, 1]} : vector<8x96xf32> to vector<8x32xf32>
    %323 = math.tanh %321 : vector<8x32xf32>
    %324 = arith.mulf %322, %323 : vector<8x32xf32>
    %c5_i32_78 = arith.constant 5 : i32
    %325 = vector.broadcast %c5_i32_78 : i32 to vector<8x1xi32>
    %326 = arith.cmpi eq, %184, %325 : vector<8x1xi32>
    %327 = vector.shape_cast %326 : vector<8x1xi1> to vector<8x1xi1>
    %328 = vector.broadcast %327 : vector<8x1xi1> to vector<8x32xi1>
    %329 = arith.select %328, %324, %305 : vector<8x32xi1>, vector<8x32xf32>
    %c184 = arith.constant 184 : index
    %c0_79 = arith.constant 0 : index
    %330 = vector.load %arg4[%c184, %c0_79] : memref<312x128xf32, #tpu.memory_space<vmem>>, vector<99x128xf32>
    %c288 = arith.constant 288 : index
    %c0_80 = arith.constant 0 : index
    %331 = vector.load %arg4[%c288, %c0_80] : memref<312x128xf32, #tpu.memory_space<vmem>>, vector<1x128xf32>
    %c296 = arith.constant 296 : index
    %c0_81 = arith.constant 0 : index
    %332 = vector.load %arg4[%c296, %c0_81] : memref<312x128xf32, #tpu.memory_space<vmem>>, vector<1x128xf32>
    %c304 = arith.constant 304 : index
    %c0_82 = arith.constant 0 : index
    %333 = vector.load %arg4[%c304, %c0_82] : memref<312x128xf32, #tpu.memory_space<vmem>>, vector<1x1xf32>
    %334 = tpu.concatenate %157, %23, %329, %176 in 1 : vector<8x32xf32>, vector<8x32xf32>, vector<8x32xf32>, vector<8x3xf32> -> vector<8x99xf32>
    %cst_83 = arith.constant dense<0.000000e+00> : vector<8x128xf32>
    %335 = tpu.matmul %334, %330, %cst_83 {dimension_numbers = #tpu.dot_dimension_numbers<[1], [0], [0], [1], [0, 0, 1, 1], [], []>} : vector<8x99xf32>, vector<99x128xf32>, vector<8x128xf32> -> vector<8x128xf32>
    %336 = vector.broadcast %331 : vector<1x128xf32> to vector<8x128xf32>
    %337 = arith.addf %335, %336 : vector<8x128xf32>
    %cst_84 = arith.constant 0.000000e+00 : f32
    %338 = vector.broadcast %cst_84 : f32 to vector<8x128xf32>
    %339 = arith.maximumf %337, %338 : vector<8x128xf32>
    %340 = vector.broadcast %332 : vector<1x128xf32> to vector<8x128xf32>
    %341 = arith.mulf %339, %340 : vector<8x128xf32>
    %cst_85 = arith.constant dense<0.000000e+00> : vector<8xf32>
    %342 = vector.multi_reduction <add>, %341, %cst_85 [1] : vector<8x128xf32> to vector<8xf32>
    %343 = vector.shape_cast %342 : vector<8xf32> to vector<8x1xf32>
    %344 = vector.broadcast %333 : vector<1x1xf32> to vector<8x1xf32>
    %345 = arith.addf %343, %344 : vector<8x1xf32>
    %c0_86 = arith.constant 0 : index
    %c0_87 = arith.constant 0 : index
    %346 = vector.load %arg5[%c0_86, %c0_87] : memref<8x1xf32, #tpu.memory_space<vmem>>, vector<8x1xf32>
    tpu.vector_store %arg5[%c0_86, %c0_87], %345 {strides = array<i32>} : memref<8x1xf32, #tpu.memory_space<vmem>>, vector<8x1xf32>,
    return
  }
}

</mosaic_0001>

<llo_original>
// kernel: network_forward.1
$region0: #{network_forward.1}
  #allocation0 [shape = 'u32[]', space=smem, size = 0x4, offset = 0x4, fixed_abs, tag = 'smem constant byte address 0x4 - core index']
  #allocation1 [shape = 'u32[144,128]{1,0:T(1,128)}', space=vmem, size = 0x12000, scoped, tag = 'internal scratch']
  #allocation2 [shape = 'f32[64,256]{1,0:T(8,128)}', space=vmem, size = 0x10000, scoped, tag = 'scratch operand']
  #allocation3 [shape = 'f32[48,128]{1,0:T(8,128)}', space=vmem, size = 0x6000, scoped, tag = 'scratch operand']
  %s0 = inlined_call_operand.vmem [shape: f32[8,8,10], index: 0, kind: input, shape index: {}]
  %s1 = inlined_call_operand.vmem [shape: f32[6,8,4], index: 1, kind: input, shape index: {}]
  %s2 = inlined_call_operand.vmem [shape: f32[8,3], index: 2, kind: input, shape index: {}]
  %s3 = inlined_call_operand.vmem [shape: f32[88,256], index: 3, kind: input, shape index: {}]
  %s4 = inlined_call_operand.vmem [shape: f32[312,128], index: 4, kind: input, shape index: {}]
  %s5 = inlined_call_operand.vmem [shape: f32[8,1], index: 5, kind: output, shape index: {}]
  %s6 = sld [smem:[#allocation0]]
  $region30: #{network_forward.1} parent=0
    _
  %s8 = ssub.s32 1, %s6
  %s9 = scalar_select 0, %s8, %s6
  // Predicated region
  $region2: #{network_forward.1} parent=0 // pred_check
    _
  $region3: #{network_forward.1} parent=0 // pred_check_branch
    %11 = sbr.rel (0) target = $region5
  $region4: #{network_forward.1} parent=0 // pred_region
    _
  $region5: #{network_forward.1} parent=0 // pred_fallthru
    _
  // Predicated region
  $region6: #{network_forward.1} parent=0 // pred_check
    _
  $region7: #{network_forward.1} parent=0 // pred_check_branch
    %13 = sbr.rel (0) target = $region9
  $region8: #{network_forward.1} parent=0 // pred_region
    _
  $region9: #{network_forward.1} parent=0 // pred_fallthru
    _
  // Predicated region
  $region10: #{network_forward.1} parent=0 // pred_check
    _
  $region11: #{network_forward.1} parent=0 // pred_check_branch
    %15 = sbr.rel (0) target = $region13
  $region12: #{network_forward.1} parent=0 // pred_region
    _
  $region13: #{network_forward.1} parent=0 // pred_fallthru
    _
  // Predicated region
  $region14: #{network_forward.1} parent=0 // pred_check
    _
  $region15: #{network_forward.1} parent=0 // pred_check_branch
    %17 = sbr.rel (0) target = $region17
  $region16: #{network_forward.1} parent=0 // pred_region
    _
  $region17: #{network_forward.1} parent=0 // pred_fallthru
    _
  // Predicated region
  $region18: #{network_forward.1} parent=0 // pred_check
    _
  $region19: #{network_forward.1} parent=0 // pred_check_branch
    %19 = sbr.rel (0) target = $region21
  $region20: #{network_forward.1} parent=0 // pred_region
    _
  $region21: #{network_forward.1} parent=0 // pred_fallthru
    _
  %v20 = vld [vmem:[%s3] sm:$0xff]
  %v21 = vld [vmem:[%s3 + $0x8] sm:$0xff]
  %v22 = vld [vmem:[%s3 + $0x10] sm:$0x3]
  %v23 = vld [vmem:[%s3 + $0x18] sm:$0x3]
  %s24 = scalar_lea.vmem %s3, 160
  %v25 = vld [vmem:[%s24] ss:$8 sm:$0x3]
  %v26 = vld [vmem:[%s0] sm:$0xff]
  %v27 = vld [vmem:[%s0 + $0x8] sm:$0xff]
  %v28 = vld [vmem:[%s0 + $0x10] sm:$0xff]
  %v29 = vld [vmem:[%s0 + $0x18] sm:$0xff]
  %v30 = vld [vmem:[%s0 + $0x20] sm:$0xff]
  %v31 = vld [vmem:[%s0 + $0x28] sm:$0xff]
  %v32 = vld [vmem:[%s0 + $0x30] sm:$0xff]
  %v33 = vld [vmem:[%s0 + $0x38] sm:$0xff]
  %v35 = vlaneseq
  %v36 = vshrl.u32 %v35, 7
  %v37 = vsub.s32 0, %v36
  %v38 = vrot.slane %v25, %v37
  %v39 = vlaneseq
  %v40 = vshrl.u32 %v39, 7
  %v41 = vsub.s32 1, %v40
  %v42 = vrot.slane %v25, %v41
  %vm45 = vcmask 80896
  %v47 = vsel %vm45, %v26, 0
  %v50 = vsel %vm45, %v27, 0
  %v53 = vsel %vm45, %v28, 0
  %v56 = vsel %vm45, %v29, 0
  %v59 = vsel %vm45, %v30, 0
  %v62 = vsel %vm45, %v31, 0
  %v65 = vsel %vm45, %v32, 0
  %v68 = vsel %vm45, %v33, 0
  %vm70 = vcmask 1041408
  %v72 = vsel %vm70, %v22, 0
  %v75 = vsel %vm70, %v23, 0
  %77 = vmatprep.subr.mxu0 %v21
  %78 = vmatpush1.msra.mxu0 %v20
  %79 = vmatprep.subr.mxu0 %v75
  %80 = vmatpush1.msra.mxu0 %v72
  %81 = vmatprep.subr.mxu0 0.0
  %82 = vmatpush1.msra.mxu0 0.0
  %83 = vmatprep.subr.mxu0 0.0
  %84 = vmatpush1.msra.mxu0 0.0
  %85 = vmatprep.subr.mxu0 0.0
  %86 = vmatpush1.msra.mxu0 0.0
  %87 = vmatprep.subr.mxu0 0.0
  %88 = vmatpush1.msra.mxu0 0.0
  %89 = vmatprep.subr.mxu0 0.0
  %90 = vmatpush1.msra.mxu0 0.0
  %91 = vmatprep.subr.mxu0 0.0
  %92 = vmatpush1.msra.mxu0 0.0
  %93 = vmatprep.subr.mxu0 0.0
  %94 = vmatpush1.msra.mxu0 0.0
  %95 = vmatprep.subr.mxu0 0.0
  %96 = vmatpush1.msra.mxu0 0.0
  %97 = vmatprep.subr.mxu0 0.0
  %98 = vmatpush1.msra.mxu0 0.0
  %99 = vmatprep.subr.mxu0 0.0
  %100 = vmatpush1.msra.mxu0 0.0
  %101 = vmatprep.subr.mxu0 0.0
  %102 = vmatpush1.msra.mxu0 0.0
  %103 = vmatprep.subr.mxu0 0.0
  %104 = vmatpush1.msra.mxu0 0.0
  %105 = vmatprep.subr.mxu0 0.0
  %106 = vmatpush1.msra.mxu0 0.0
  %107 = vmatprep.subr.mxu0 0.0
  %108 = vmatpush1.msra.mxu0 0.0
  %109 = vmatprep.subr.mxu0 0.0
  %110 = vmatpush1.msra.mxu0 0.0
  %111 = vmatprep.subr.mxu0 0.0
  %112 = vmatpush1.msra.mxu0 0.0
  %113 = vmatprep.subr.mxu0 0.0
  %114 = vmatpush1.msra.mxu0 0.0
  %115 = vmatprep.subr.mxu0 0.0
  %116 = vmatpush1.msra.mxu0 0.0
  %117 = vmatprep.subr.mxu0 0.0
  %118 = vmatpush1.msra.mxu0 0.0
  %119 = vmatprep.subr.mxu0 0.0
  %120 = vmatpush1.msra.mxu0 0.0
  %121 = vmatprep.subr.mxu0 0.0
  %122 = vmatpush1.msra.mxu0 0.0
  %123 = vmatprep.subr.mxu0 0.0
  %124 = vmatpush1.msra.mxu0 0.0
  %125 = vmatprep.subr.mxu0 0.0
  %126 = vmatpush1.msra.mxu0 0.0
  %127 = vmatprep.subr.mxu0 0.0
  %128 = vmatpush1.msra.mxu0 0.0
  %129 = vmatprep.subr.mxu0 0.0
  %130 = vmatpush1.msra.mxu0 0.0
  %131 = vmatprep.subr.mxu0 0.0
  %132 = vmatpush1.msra.mxu0 0.0
  %133 = vmatprep.subr.mxu0 0.0
  %134 = vmatpush1.msra.mxu0 0.0
  %135 = vmatprep.subr.mxu0 0.0
  %136 = vmatpush1.msra.mxu0 0.0
  %137 = vmatprep.subr.mxu0 0.0
  %138 = vmatpush1.msra.mxu0 0.0
  %139 = vmatprep.subr.mxu0 0.0
  %140 = vmatpush1.msra.mxu0 0.0
  %141 = vmatprep.mubr.f32.mxu0 0.0
  %142 = vmatmul.mubr.f32.gmra.mrb[0].mxu0 %v47
  %v143 = vpop.f32.mrb[0].mxu0
  %v144 = vadd.f32 %v38, %v143
  %v145 = vpop.f32.mrb[0].mxu0
  %v146 = vadd.f32 %v42, %v145
  %147 = vmatprep.mubr.f32.mxu0 0.0
  %148 = vmatmul.mubr.f32.gmra.mrb[0].mxu0 %v50
  %v149 = vpop.f32.mrb[0].mxu0
  %v150 = vadd.f32 %v38, %v149
  %v151 = vpop.f32.mrb[0].mxu0
  %v152 = vadd.f32 %v42, %v151
  %153 = vmatprep.mubr.f32.mxu0 0.0
  %154 = vmatmul.mubr.f32.gmra.mrb[0].mxu0 %v53
  %v155 = vpop.f32.mrb[0].mxu0
  %v156 = vadd.f32 %v38, %v155
  %v157 = vpop.f32.mrb[0].mxu0
  %v158 = vadd.f32 %v42, %v157
  %159 = vmatprep.mubr.f32.mxu0 0.0
  %160 = vmatmul.mubr.f32.gmra.mrb[0].mxu0 %v56
  %v161 = vpop.f32.mrb[0].mxu0
  %v162 = vadd.f32 %v38, %v161
  %v163 = vpop.f32.mrb[0].mxu0
  %v164 = vadd.f32 %v42, %v163
  %165 = vmatprep.mubr.f32.mxu0 0.0
  %166 = vmatmul.mubr.f32.gmra.mrb[0].mxu0 %v59
  %v167 = vpop.f32.mrb[0].mxu0
  %v168 = vadd.f32 %v38, %v167
  %v169 = vpop.f32.mrb[0].mxu0
  %v170 = vadd.f32 %v42, %v169
  %171 = vmatprep.mubr.f32.mxu0 0.0
  %172 = vmatmul.mubr.f32.gmra.mrb[0].mxu0 %v62
  %v173 = vpop.f32.mrb[0].mxu0
  %v174 = vadd.f32 %v38, %v173
  %v175 = vpop.f32.mrb[0].mxu0
  %v176 = vadd.f32 %v42, %v175
  %177 = vmatprep.mubr.f32.mxu0 0.0
  %178 = vmatmul.mubr.f32.gmra.mrb[0].mxu0 %v65
  %v179 = vpop.f32.mrb[0].mxu0
  %v180 = vadd.f32 %v38, %v179
  %v181 = vpop.f32.mrb[0].mxu0
  %v182 = vadd.f32 %v42, %v181
  %183 = vmatprep.mubr.f32.mxu0 0.0
  %184 = vmatmul.mubr.f32.gmra.mrb[0].mxu0 %v68
  %v185 = vpop.f32.mrb[0].mxu0
  %v186 = vadd.f32 %v38, %v185
  %v187 = vpop.f32.mrb[0].mxu0
  %v188 = vadd.f32 %v42, %v187
  %189 = vdwg.mxu0
  %190 = vst [vmem:[#allocation2] sm:$0xff] %v144
  %191 = vst [vmem:[#allocation2 + $0x8] sm:$0xff] %v146
  %192 = vst [vmem:[#allocation2 + $0x10] sm:$0xff] %v150
  %193 = vst [vmem:[#allocation2 + $0x18] sm:$0xff] %v152
  %194 = vst [vmem:[#allocation2 + $0x20] sm:$0xff] %v156
  %195 = vst [vmem:[#allocation2 + $0x28] sm:$0xff] %v158
  %196 = vst [vmem:[#allocation2 + $0x30] sm:$0xff] %v162
  %197 = vst [vmem:[#allocation2 + $0x38] sm:$0xff] %v164
  %198 = vst [vmem:[#allocation2 + $0x40] sm:$0xff] %v168
  %199 = vst [vmem:[#allocation2 + $0x48] sm:$0xff] %v170
  %200 = vst [vmem:[#allocation2 + $0x50] sm:$0xff] %v174
  %201 = vst [vmem:[#allocation2 + $0x58] sm:$0xff] %v176
  %202 = vst [vmem:[#allocation2 + $0x60] sm:$0xff] %v180
  %203 = vst [vmem:[#allocation2 + $0x68] sm:$0xff] %v182
  %204 = vst [vmem:[#allocation2 + $0x70] sm:$0xff] %v186
  %205 = vst [vmem:[#allocation2 + $0x78] sm:$0xff] %v188
  %v206 = vld [vmem:[%s3 + $0x20] sm:$0xff]
  %v207 = vld [vmem:[%s3 + $0x28] sm:$0xff]
  %v208 = vld [vmem:[%s3 + $0x30] sm:$0xff]
  %v209 = vld [vmem:[%s3 + $0x38] sm:$0xff]
  %v210 = vld [vmem:[%s3 + $0x40] sm:$0xff]
  %v211 = vld [vmem:[%s3 + $0x48] sm:$0xff]
  %v212 = vld [vmem:[%s3 + $0x50] sm:$0xff]
  %v213 = vld [vmem:[%s3 + $0x58] sm:$0xff]
  %v214 = vld [vmem:[%s3 + $0x60] sm:$0xff]
  %v215 = vld [vmem:[%s3 + $0x68] sm:$0xff]
  %v216 = vld [vmem:[%s3 + $0x70] sm:$0xff]
  %v217 = vld [vmem:[%s3 + $0x78] sm:$0xff]
  %v218 = vld [vmem:[%s3 + $0x80] sm:$0xff]
  %v219 = vld [vmem:[%s3 + $0x88] sm:$0xff]
  %v220 = vld [vmem:[%s3 + $0x90] sm:$0xff]
  %v221 = vld [vmem:[%s3 + $0x98] sm:$0xff]
  %v222 = vld [vmem:[#allocation2] sm:$0xff]
  %v223 = vld [vmem:[#allocation2 + $0x8] sm:$0xff]
  %v224 = vxor.u32 %v222, 2147483648
  %v225 = vxor.u32 %v223, 2147483648
  %v226 = vmul.f32 %v224, 1.442695
  %v227 = vpow.pop %v226
  %v228 = vmul.f32 %v225, 1.442695
  %v229 = vpow.pop %v228
  %v230 = vadd.f32 %v227, 1.0
  %v231 = vadd.f32 %v229, 1.0
  %v232 = vrcp.pop %v230
  %v233 = vmul.f32 1.0, %v232
  %v234 = vrcp.pop %v231
  %v235 = vmul.f32 1.0, %v234
  %v236 = vtanh.pop %v223
  %238 = vrot.lane.b32.xlu0 %v236, 64
  %v239 = vpop.permute.xlu0 %238
  %v241 = vmul.f32 %v233, %v239
  %v242 = vtanh.pop %v241
  %v243 = vmul.f32 %v235, %v242
  %v244 = vld [vmem:[#allocation2 + $0x10] sm:$0xff]
  %v245 = vld [vmem:[#allocation2 + $0x18] sm:$0xff]
  %vm246 = vcmask 523264
  %v248 = vsel %vm246, %v243, 0
  %250 = vmatprep.subr.mxu0 %v207
  %251 = vmatpush1.msra.mxu0 %v206
  %252 = vmatprep.subr.mxu0 %v209
  %253 = vmatpush1.msra.mxu0 %v208
  %254 = vmatprep.subr.mxu0 %v211
  %255 = vmatpush1.msra.mxu0 %v210
  %256 = vmatprep.subr.mxu0 %v213
  %257 = vmatpush1.msra.mxu0 %v212
  %258 = vmatprep.subr.mxu0 %v215
  %259 = vmatpush1.msra.mxu0 %v214
  %260 = vmatprep.subr.mxu0 %v217
  %261 = vmatpush1.msra.mxu0 %v216
  %262 = vmatprep.subr.mxu0 %v219
  %263 = vmatpush1.msra.mxu0 %v218
  %264 = vmatprep.subr.mxu0 %v221
  %265 = vmatpush1.msra.mxu0 %v220
  %266 = vmatprep.subr.mxu0 0.0
  %267 = vmatpush1.msra.mxu0 0.0
  %268 = vmatprep.subr.mxu0 0.0
  %269 = vmatpush1.msra.mxu0 0.0
  %270 = vmatprep.subr.mxu0 0.0
  %271 = vmatpush1.msra.mxu0 0.0
  %272 = vmatprep.subr.mxu0 0.0
  %273 = vmatpush1.msra.mxu0 0.0
  %274 = vmatprep.subr.mxu0 0.0
  %275 = vmatpush1.msra.mxu0 0.0
  %276 = vmatprep.subr.mxu0 0.0
  %277 = vmatpush1.msra.mxu0 0.0
  %278 = vmatprep.subr.mxu0 0.0
  %279 = vmatpush1.msra.mxu0 0.0
  %280 = vmatprep.subr.mxu0 0.0
  %281 = vmatpush1.msra.mxu0 0.0
  %282 = vmatprep.subr.mxu0 0.0
  %283 = vmatpush1.msra.mxu0 0.0
  %284 = vmatprep.subr.mxu0 0.0
  %285 = vmatpush1.msra.mxu0 0.0
  %286 = vmatprep.subr.mxu0 0.0
  %287 = vmatpush1.msra.mxu0 0.0
  %288 = vmatprep.subr.mxu0 0.0
  %289 = vmatpush1.msra.mxu0 0.0
  %290 = vmatprep.subr.mxu0 0.0
  %291 = vmatpush1.msra.mxu0 0.0
  %292 = vmatprep.subr.mxu0 0.0
  %293 = vmatpush1.msra.mxu0 0.0
  %294 = vmatprep.subr.mxu0 0.0
  %295 = vmatpush1.msra.mxu0 0.0
  %296 = vmatprep.subr.mxu0 0.0
  %297 = vmatpush1.msra.mxu0 0.0
  %298 = vmatprep.subr.mxu0 0.0
  %299 = vmatpush1.msra.mxu0 0.0
  %300 = vmatprep.subr.mxu0 0.0
  %301 = vmatpush1.msra.mxu0 0.0
  %302 = vmatprep.subr.mxu0 0.0
  %303 = vmatpush1.msra.mxu0 0.0
  %304 = vmatprep.subr.mxu0 0.0
  %305 = vmatpush1.msra.mxu0 0.0
  %306 = vmatprep.subr.mxu0 0.0
  %307 = vmatpush1.msra.mxu0 0.0
  %308 = vmatprep.subr.mxu0 0.0
  %309 = vmatpush1.msra.mxu0 0.0
  %310 = vmatprep.subr.mxu0 0.0
  %311 = vmatpush1.msra.mxu0 0.0
  %312 = vmatprep.subr.mxu0 0.0
  %313 = vmatpush1.msra.mxu0 0.0
  %314 = vmatprep.mubr.f32.mxu0 0.0
  %315 = vmatmul.mubr.f32.gmra.mrb[0].mxu0 %v248
  %v316 = vpop.f32.mrb[0].mxu0
  %v317 = vadd.f32 %v244, %v316
  %v318 = vpop.f32.mrb[0].mxu0
  %v319 = vadd.f32 %v245, %v318
  %320 = vdwg.mxu0
  %v321 = vxor.u32 %v317, 2147483648
  %v322 = vxor.u32 %v319, 2147483648
  %v323 = vmul.f32 %v321, 1.442695
  %v324 = vpow.pop %v323
  %v325 = vmul.f32 %v322, 1.442695
  %v326 = vpow.pop %v325
  %v327 = vadd.f32 %v324, 1.0
  %v328 = vadd.f32 %v326, 1.0
  %v329 = vrcp.pop %v327
  %v330 = vmul.f32 1.0, %v329
  %v331 = vrcp.pop %v328
  %v332 = vmul.f32 1.0, %v331
  %v333 = vtanh.pop %v319
  %335 = vrot.lane.b32.xlu0 %v241, 64
  %v336 = vpop.permute.xlu0 %335
  %v338 = vmul.f32 %v330, %v336
  %340 = vrot.lane.b32.xlu0 %v333, 64
  %v341 = vpop.permute.xlu0 %340
  %v343 = vmul.f32 %v330, %v341
  %345 = vrot.lane.b32.xlu0 %v343, 64
  %v346 = vpop.permute.xlu0 %345
  %v348 = vadd.f32 %v338, %v346
  %v349 = vtanh.pop %v348
  %351 = vrot.lane.b32.xlu0 %v349, 64
  %v352 = vpop.permute.xlu0 %351
  %v354 = vmul.f32 %v332, %v352
  %v355 = vld [vmem:[#allocation2 + $0x20] sm:$0xff]
  %v356 = vld [vmem:[#allocation2 + $0x28] sm:$0xff]
  %v358 = vsel %vm246, %v354, 0
  %360 = vmatprep.subr.mxu0 %v207
  %361 = vmatpush1.msra.mxu0 %v206
  %362 = vmatprep.subr.mxu0 %v209
  %363 = vmatpush1.msra.mxu0 %v208
  %364 = vmatprep.subr.mxu0 %v211
  %365 = vmatpush1.msra.mxu0 %v210
  %366 = vmatprep.subr.mxu0 %v213
  %367 = vmatpush1.msra.mxu0 %v212
  %368 = vmatprep.subr.mxu0 %v215
  %369 = vmatpush1.msra.mxu0 %v214
  %370 = vmatprep.subr.mxu0 %v217
  %371 = vmatpush1.msra.mxu0 %v216
  %372 = vmatprep.subr.mxu0 %v219
  %373 = vmatpush1.msra.mxu0 %v218
  %374 = vmatprep.subr.mxu0 %v221
  %375 = vmatpush1.msra.mxu0 %v220
  %376 = vmatprep.subr.mxu0 0.0
  %377 = vmatpush1.msra.mxu0 0.0
  %378 = vmatprep.subr.mxu0 0.0
  %379 = vmatpush1.msra.mxu0 0.0
  %380 = vmatprep.subr.mxu0 0.0
  %381 = vmatpush1.msra.mxu0 0.0
  %382 = vmatprep.subr.mxu0 0.0
  %383 = vmatpush1.msra.mxu0 0.0
  %384 = vmatprep.subr.mxu0 0.0
  %385 = vmatpush1.msra.mxu0 0.0
  %386 = vmatprep.subr.mxu0 0.0
  %387 = vmatpush1.msra.mxu0 0.0
  %388 = vmatprep.subr.mxu0 0.0
  %389 = vmatpush1.msra.mxu0 0.0
  %390 = vmatprep.subr.mxu0 0.0
  %391 = vmatpush1.msra.mxu0 0.0
  %392 = vmatprep.subr.mxu0 0.0
  %393 = vmatpush1.msra.mxu0 0.0
  %394 = vmatprep.subr.mxu0 0.0
  %395 = vmatpush1.msra.mxu0 0.0
  %396 = vmatprep.subr.mxu0 0.0
  %397 = vmatpush1.msra.mxu0 0.0
  %398 = vmatprep.subr.mxu0 0.0
  %399 = vmatpush1.msra.mxu0 0.0
  %400 = vmatprep.subr.mxu0 0.0
  %401 = vmatpush1.msra.mxu0 0.0
  %402 = vmatprep.subr.mxu0 0.0
  %403 = vmatpush1.msra.mxu0 0.0
  %404 = vmatprep.subr.mxu0 0.0
  %405 = vmatpush1.msra.mxu0 0.0
  %406 = vmatprep.subr.mxu0 0.0
  %407 = vmatpush1.msra.mxu0 0.0
  %408 = vmatprep.subr.mxu0 0.0
  %409 = vmatpush1.msra.mxu0 0.0
  %410 = vmatprep.subr.mxu0 0.0
  %411 = vmatpush1.msra.mxu0 0.0
  %412 = vmatprep.subr.mxu0 0.0
  %413 = vmatpush1.msra.mxu0 0.0
  %414 = vmatprep.subr.mxu0 0.0
  %415 = vmatpush1.msra.mxu0 0.0
  %416 = vmatprep.subr.mxu0 0.0
  %417 = vmatpush1.msra.mxu0 0.0
  %418 = vmatprep.subr.mxu0 0.0
  %419 = vmatpush1.msra.mxu0 0.0
  %420 = vmatprep.subr.mxu0 0.0
  %421 = vmatpush1.msra.mxu0 0.0
  %422 = vmatprep.subr.mxu0 0.0
  %423 = vmatpush1.msra.mxu0 0.0
  %424 = vmatprep.mubr.f32.mxu0 0.0
  %425 = vmatmul.mubr.f32.gmra.mrb[0].mxu0 %v358
  %v426 = vpop.f32.mrb[0].mxu0
  %v427 = vadd.f32 %v355, %v426
  %v428 = vpop.f32.mrb[0].mxu0
  %v429 = vadd.f32 %v356, %v428
  %430 = vdwg.mxu0
  %v431 = vxor.u32 %v427, 2147483648
  %v432 = vxor.u32 %v429, 2147483648
  %v433 = vmul.f32 %v431, 1.442695
  %v434 = vpow.pop %v433
  %v435 = vmul.f32 %v432, 1.442695
  %v436 = vpow.pop %v435
  %v437 = vadd.f32 %v434, 1.0
  %v438 = vadd.f32 %v436, 1.0
  %v439 = vrcp.pop %v437
  %v440 = vmul.f32 1.0, %v439
  %v441 = vrcp.pop %v438
  %v442 = vmul.f32 1.0, %v441
  %v443 = vtanh.pop %v429
  %v444 = vmul.f32 %v440, %v348
  %446 = vrot.lane.b32.xlu0 %v443, 64
  %v447 = vpop.permute.xlu0 %446
  %v449 = vmul.f32 %v440, %v447
  %451 = vrot.lane.b32.xlu0 %v449, 64
  %v452 = vpop.permute.xlu0 %451
  %v454 = vadd.f32 %v444, %v452
  %v455 = vtanh.pop %v454
  %457 = vrot.lane.b32.xlu0 %v455, 64
  %v458 = vpop.permute.xlu0 %457
  %v460 = vmul.f32 %v442, %v458
  %v461 = vld [vmem:[#allocation2 + $0x30] sm:$0xff]
  %v462 = vld [vmem:[#allocation2 + $0x38] sm:$0xff]
  %v464 = vsel %vm246, %v460, 0
  %466 = vmatprep.subr.mxu0 %v207
  %467 = vmatpush1.msra.mxu0 %v206
  %468 = vmatprep.subr.mxu0 %v209
  %469 = vmatpush1.msra.mxu0 %v208
  %470 = vmatprep.subr.mxu0 %v211
  %471 = vmatpush1.msra.mxu0 %v210
  %472 = vmatprep.subr.mxu0 %v213
  %473 = vmatpush1.msra.mxu0 %v212
  %474 = vmatprep.subr.mxu0 %v215
  %475 = vmatpush1.msra.mxu0 %v214
  %476 = vmatprep.subr.mxu0 %v217
  %477 = vmatpush1.msra.mxu0 %v216
  %478 = vmatprep.subr.mxu0 %v219
  %479 = vmatpush1.msra.mxu0 %v218
  %480 = vmatprep.subr.mxu0 %v221
  %481 = vmatpush1.msra.mxu0 %v220
  %482 = vmatprep.subr.mxu0 0.0
  %483 = vmatpush1.msra.mxu0 0.0
  %484 = vmatprep.subr.mxu0 0.0
  %485 = vmatpush1.msra.mxu0 0.0
  %486 = vmatprep.subr.mxu0 0.0
  %487 = vmatpush1.msra.mxu0 0.0
  %488 = vmatprep.subr.mxu0 0.0
  %489 = vmatpush1.msra.mxu0 0.0
  %490 = vmatprep.subr.mxu0 0.0
  %491 = vmatpush1.msra.mxu0 0.0
  %492 = vmatprep.subr.mxu0 0.0
  %493 = vmatpush1.msra.mxu0 0.0
  %494 = vmatprep.subr.mxu0 0.0
  %495 = vmatpush1.msra.mxu0 0.0
  %496 = vmatprep.subr.mxu0 0.0
  %497 = vmatpush1.msra.mxu0 0.0
  %498 = vmatprep.subr.mxu0 0.0
  %499 = vmatpush1.msra.mxu0 0.0
  %500 = vmatprep.subr.mxu0 0.0
  %501 = vmatpush1.msra.mxu0 0.0
  %502 = vmatprep.subr.mxu0 0.0
  %503 = vmatpush1.msra.mxu0 0.0
  %504 = vmatprep.subr.mxu0 0.0
  %505 = vmatpush1.msra.mxu0 0.0
  %506 = vmatprep.subr.mxu0 0.0
  %507 = vmatpush1.msra.mxu0 0.0
  %508 = vmatprep.subr.mxu0 0.0
  %509 = vmatpush1.msra.mxu0 0.0
  %510 = vmatprep.subr.mxu0 0.0
  %511 = vmatpush1.msra.mxu0 0.0
  %512 = vmatprep.subr.mxu0 0.0
  %513 = vmatpush1.msra.mxu0 0.0
  %514 = vmatprep.subr.mxu0 0.0
  %515 = vmatpush1.msra.mxu0 0.0
  %516 = vmatprep.subr.mxu0 0.0
  %517 = vmatpush1.msra.mxu0 0.0
  %518 = vmatprep.subr.mxu0 0.0
  %519 = vmatpush1.msra.mxu0 0.0
  %520 = vmatprep.subr.mxu0 0.0
  %521 = vmatpush1.msra.mxu0 0.0
  %522 = vmatprep.subr.mxu0 0.0
  %523 = vmatpush1.msra.mxu0 0.0
  %524 = vmatprep.subr.mxu0 0.0
  %525 = vmatpush1.msra.mxu0 0.0
  %526 = vmatprep.subr.mxu0 0.0
  %527 = vmatpush1.msra.mxu0 0.0
  %528 = vmatprep.subr.mxu0 0.0
  %529 = vmatpush1.msra.mxu0 0.0
  %530 = vmatprep.mubr.f32.mxu0 0.0
  %531 = vmatmul.mubr.f32.gmra.mrb[0].mxu0 %v464
  %v532 = vpop.f32.mrb[0].mxu0
  %v533 = vadd.f32 %v461, %v532
  %v534 = vpop.f32.mrb[0].mxu0
  %v535 = vadd.f32 %v462, %v534
  %536 = vdwg.mxu0
  %v537 = vxor.u32 %v533, 2147483648
  %v538 = vxor.u32 %v535, 2147483648
  %v539 = vmul.f32 %v537, 1.442695
  %v540 = vpow.pop %v539
  %v541 = vmul.f32 %v538, 1.442695
  %v542 = vpow.pop %v541
  %v543 = vadd.f32 %v540, 1.0
  %v544 = vadd.f32 %v542, 1.0
  %v545 = vrcp.pop %v543
  %v546 = vmul.f32 1.0, %v545
  %v547 = vrcp.pop %v544
  %v548 = vmul.f32 1.0, %v547
  %v549 = vtanh.pop %v535
  %v550 = vmul.f32 %v546, %v454
  %552 = vrot.lane.b32.xlu0 %v549, 64
  %v553 = vpop.permute.xlu0 %552
  %v555 = vmul.f32 %v546, %v553
  %557 = vrot.lane.b32.xlu0 %v555, 64
  %v558 = vpop.permute.xlu0 %557
  %v560 = vadd.f32 %v550, %v558
  %v561 = vtanh.pop %v560
  %563 = vrot.lane.b32.xlu0 %v561, 64
  %v564 = vpop.permute.xlu0 %563
  %v566 = vmul.f32 %v548, %v564
  %v567 = vld [vmem:[#allocation2 + $0x40] sm:$0xff]
  %v568 = vld [vmem:[#allocation2 + $0x48] sm:$0xff]
  %v570 = vsel %vm246, %v566, 0
  %572 = vmatprep.subr.mxu0 %v207
  %573 = vmatpush1.msra.mxu0 %v206
  %574 = vmatprep.subr.mxu0 %v209
  %575 = vmatpush1.msra.mxu0 %v208
  %576 = vmatprep.subr.mxu0 %v211
  %577 = vmatpush1.msra.mxu0 %v210
  %578 = vmatprep.subr.mxu0 %v213
  %579 = vmatpush1.msra.mxu0 %v212
  %580 = vmatprep.subr.mxu0 %v215
  %581 = vmatpush1.msra.mxu0 %v214
  %582 = vmatprep.subr.mxu0 %v217
  %583 = vmatpush1.msra.mxu0 %v216
  %584 = vmatprep.subr.mxu0 %v219
  %585 = vmatpush1.msra.mxu0 %v218
  %586 = vmatprep.subr.mxu0 %v221
  %587 = vmatpush1.msra.mxu0 %v220
  %588 = vmatprep.subr.mxu0 0.0
  %589 = vmatpush1.msra.mxu0 0.0
  %590 = vmatprep.subr.mxu0 0.0
  %591 = vmatpush1.msra.mxu0 0.0
  %592 = vmatprep.subr.mxu0 0.0
  %593 = vmatpush1.msra.mxu0 0.0
  %594 = vmatprep.subr.mxu0 0.0
  %595 = vmatpush1.msra.mxu0 0.0
  %596 = vmatprep.subr.mxu0 0.0
  %597 = vmatpush1.msra.mxu0 0.0
  %598 = vmatprep.subr.mxu0 0.0
  %599 = vmatpush1.msra.mxu0 0.0
  %600 = vmatprep.subr.mxu0 0.0
  %601 = vmatpush1.msra.mxu0 0.0
  %602 = vmatprep.subr.mxu0 0.0
  %603 = vmatpush1.msra.mxu0 0.0
  %604 = vmatprep.subr.mxu0 0.0
  %605 = vmatpush1.msra.mxu0 0.0
  %606 = vmatprep.subr.mxu0 0.0
  %607 = vmatpush1.msra.mxu0 0.0
  %608 = vmatprep.subr.mxu0 0.0
  %609 = vmatpush1.msra.mxu0 0.0
  %610 = vmatprep.subr.mxu0 0.0
  %611 = vmatpush1.msra.mxu0 0.0
  %612 = vmatprep.subr.mxu0 0.0
  %613 = vmatpush1.msra.mxu0 0.0
  %614 = vmatprep.subr.mxu0 0.0
  %615 = vmatpush1.msra.mxu0 0.0
  %616 = vmatprep.subr.mxu0 0.0
  %617 = vmatpush1.msra.mxu0 0.0
  %618 = vmatprep.subr.mxu0 0.0
  %619 = vmatpush1.msra.mxu0 0.0
  %620 = vmatprep.subr.mxu0 0.0
  %621 = vmatpush1.msra.mxu0 0.0
  %622 = vmatprep.subr.mxu0 0.0
  %623 = vmatpush1.msra.mxu0 0.0
  %624 = vmatprep.subr.mxu0 0.0
  %625 = vmatpush1.msra.mxu0 0.0
  %626 = vmatprep.subr.mxu0 0.0
  %627 = vmatpush1.msra.mxu0 0.0
  %628 = vmatprep.subr.mxu0 0.0
  %629 = vmatpush1.msra.mxu0 0.0
  %630 = vmatprep.subr.mxu0 0.0
  %631 = vmatpush1.msra.mxu0 0.0
  %632 = vmatprep.subr.mxu0 0.0
  %633 = vmatpush1.msra.mxu0 0.0
  %634 = vmatprep.subr.mxu0 0.0
  %635 = vmatpush1.msra.mxu0 0.0
  %636 = vmatprep.mubr.f32.mxu0 0.0
  %637 = vmatmul.mubr.f32.gmra.mrb[0].mxu0 %v570
  %v638 = vpop.f32.mrb[0].mxu0
  %v639 = vadd.f32 %v567, %v638
  %v640 = vpop.f32.mrb[0].mxu0
  %v641 = vadd.f32 %v568, %v640
  %642 = vdwg.mxu0
  %v643 = vxor.u32 %v639, 2147483648
  %v644 = vxor.u32 %v641, 2147483648
  %v645 = vmul.f32 %v643, 1.442695
  %v646 = vpow.pop %v645
  %v647 = vmul.f32 %v644, 1.442695
  %v648 = vpow.pop %v647
  %v649 = vadd.f32 %v646, 1.0
  %v650 = vadd.f32 %v648, 1.0
  %v651 = vrcp.pop %v649
  %v652 = vmul.f32 1.0, %v651
  %v653 = vrcp.pop %v650
  %v654 = vmul.f32 1.0, %v653
  %v655 = vtanh.pop %v641
  %v656 = vmul.f32 %v652, %v560
  %658 = vrot.lane.b32.xlu0 %v655, 64
  %v659 = vpop.permute.xlu0 %658
  %v661 = vmul.f32 %v652, %v659
  %663 = vrot.lane.b32.xlu0 %v661, 64
  %v664 = vpop.permute.xlu0 %663
  %v666 = vadd.f32 %v656, %v664
  %v667 = vtanh.pop %v666
  %669 = vrot.lane.b32.xlu0 %v667, 64
  %v670 = vpop.permute.xlu0 %669
  %v672 = vmul.f32 %v654, %v670
  %v673 = vld [vmem:[#allocation2 + $0x50] sm:$0xff]
  %v674 = vld [vmem:[#allocation2 + $0x58] sm:$0xff]
  %v676 = vsel %vm246, %v672, 0
  %678 = vmatprep.subr.mxu0 %v207
  %679 = vmatpush1.msra.mxu0 %v206
  %680 = vmatprep.subr.mxu0 %v209
  %681 = vmatpush1.msra.mxu0 %v208
  %682 = vmatprep.subr.mxu0 %v211
  %683 = vmatpush1.msra.mxu0 %v210
  %684 = vmatprep.subr.mxu0 %v213
  %685 = vmatpush1.msra.mxu0 %v212
  %686 = vmatprep.subr.mxu0 %v215
  %687 = vmatpush1.msra.mxu0 %v214
  %688 = vmatprep.subr.mxu0 %v217
  %689 = vmatpush1.msra.mxu0 %v216
  %690 = vmatprep.subr.mxu0 %v219
  %691 = vmatpush1.msra.mxu0 %v218
  %692 = vmatprep.subr.mxu0 %v221
  %693 = vmatpush1.msra.mxu0 %v220
  %694 = vmatprep.subr.mxu0 0.0
  %695 = vmatpush1.msra.mxu0 0.0
  %696 = vmatprep.subr.mxu0 0.0
  %697 = vmatpush1.msra.mxu0 0.0
  %698 = vmatprep.subr.mxu0 0.0
  %699 = vmatpush1.msra.mxu0 0.0
  %700 = vmatprep.subr.mxu0 0.0
  %701 = vmatpush1.msra.mxu0 0.0
  %702 = vmatprep.subr.mxu0 0.0
  %703 = vmatpush1.msra.mxu0 0.0
  %704 = vmatprep.subr.mxu0 0.0
  %705 = vmatpush1.msra.mxu0 0.0
  %706 = vmatprep.subr.mxu0 0.0
  %707 = vmatpush1.msra.mxu0 0.0
  %708 = vmatprep.subr.mxu0 0.0
  %709 = vmatpush1.msra.mxu0 0.0
  %710 = vmatprep.subr.mxu0 0.0
  %711 = vmatpush1.msra.mxu0 0.0
  %712 = vmatprep.subr.mxu0 0.0
  %713 = vmatpush1.msra.mxu0 0.0
  %714 = vmatprep.subr.mxu0 0.0
  %715 = vmatpush1.msra.mxu0 0.0
  %716 = vmatprep.subr.mxu0 0.0
  %717 = vmatpush1.msra.mxu0 0.0
  %718 = vmatprep.subr.mxu0 0.0
  %719 = vmatpush1.msra.mxu0 0.0
  %720 = vmatprep.subr.mxu0 0.0
  %721 = vmatpush1.msra.mxu0 0.0
  %722 = vmatprep.subr.mxu0 0.0
  %723 = vmatpush1.msra.mxu0 0.0
  %724 = vmatprep.subr.mxu0 0.0
  %725 = vmatpush1.msra.mxu0 0.0
  %726 = vmatprep.subr.mxu0 0.0
  %727 = vmatpush1.msra.mxu0 0.0
  %728 = vmatprep.subr.mxu0 0.0
  %729 = vmatpush1.msra.mxu0 0.0
  %730 = vmatprep.subr.mxu0 0.0
  %731 = vmatpush1.msra.mxu0 0.0
  %732 = vmatprep.subr.mxu0 0.0
  %733 = vmatpush1.msra.mxu0 0.0
  %734 = vmatprep.subr.mxu0 0.0
  %735 = vmatpush1.msra.mxu0 0.0
  %736 = vmatprep.subr.mxu0 0.0
  %737 = vmatpush1.msra.mxu0 0.0
  %738 = vmatprep.subr.mxu0 0.0
  %739 = vmatpush1.msra.mxu0 0.0
  %740 = vmatprep.subr.mxu0 0.0
  %741 = vmatpush1.msra.mxu0 0.0
  %742 = vmatprep.mubr.f32.mxu0 0.0
  %743 = vmatmul.mubr.f32.gmra.mrb[0].mxu0 %v676
  %v744 = vpop.f32.mrb[0].mxu0
  %v745 = vadd.f32 %v673, %v744
  %v746 = vpop.f32.mrb[0].mxu0
  %v747 = vadd.f32 %v674, %v746
  %748 = vdwg.mxu0
  %v749 = vxor.u32 %v745, 2147483648
  %v750 = vxor.u32 %v747, 2147483648
  %v751 = vmul.f32 %v749, 1.442695
  %v752 = vpow.pop %v751
  %v753 = vmul.f32 %v750, 1.442695
  %v754 = vpow.pop %v753
  %v755 = vadd.f32 %v752, 1.0
  %v756 = vadd.f32 %v754, 1.0
  %v757 = vrcp.pop %v755
  %v758 = vmul.f32 1.0, %v757
  %v759 = vrcp.pop %v756
  %v760 = vmul.f32 1.0, %v759
  %v761 = vtanh.pop %v747
  %v762 = vmul.f32 %v758, %v666
  %764 = vrot.lane.b32.xlu0 %v761, 64
  %v765 = vpop.permute.xlu0 %764
  %v767 = vmul.f32 %v758, %v765
  %769 = vrot.lane.b32.xlu0 %v767, 64
  %v770 = vpop.permute.xlu0 %769
  %v772 = vadd.f32 %v762, %v770
  %v773 = vtanh.pop %v772
  %775 = vrot.lane.b32.xlu0 %v773, 64
  %v776 = vpop.permute.xlu0 %775
  %v778 = vmul.f32 %v760, %v776
  %v779 = vld [vmem:[#allocation2 + $0x60] sm:$0xff]
  %v780 = vld [vmem:[#allocation2 + $0x68] sm:$0xff]
  %v782 = vsel %vm246, %v778, 0
  %784 = vmatprep.subr.mxu0 %v207
  %785 = vmatpush1.msra.mxu0 %v206
  %786 = vmatprep.subr.mxu0 %v209
  %787 = vmatpush1.msra.mxu0 %v208
  %788 = vmatprep.subr.mxu0 %v211
  %789 = vmatpush1.msra.mxu0 %v210
  %790 = vmatprep.subr.mxu0 %v213
  %791 = vmatpush1.msra.mxu0 %v212
  %792 = vmatprep.subr.mxu0 %v215
  %793 = vmatpush1.msra.mxu0 %v214
  %794 = vmatprep.subr.mxu0 %v217
  %795 = vmatpush1.msra.mxu0 %v216
  %796 = vmatprep.subr.mxu0 %v219
  %797 = vmatpush1.msra.mxu0 %v218
  %798 = vmatprep.subr.mxu0 %v221
  %799 = vmatpush1.msra.mxu0 %v220
  %800 = vmatprep.subr.mxu0 0.0
  %801 = vmatpush1.msra.mxu0 0.0
  %802 = vmatprep.subr.mxu0 0.0
  %803 = vmatpush1.msra.mxu0 0.0
  %804 = vmatprep.subr.mxu0 0.0
  %805 = vmatpush1.msra.mxu0 0.0
  %806 = vmatprep.subr.mxu0 0.0
  %807 = vmatpush1.msra.mxu0 0.0
  %808 = vmatprep.subr.mxu0 0.0
  %809 = vmatpush1.msra.mxu0 0.0
  %810 = vmatprep.subr.mxu0 0.0
  %811 = vmatpush1.msra.mxu0 0.0
  %812 = vmatprep.subr.mxu0 0.0
  %813 = vmatpush1.msra.mxu0 0.0
  %814 = vmatprep.subr.mxu0 0.0
  %815 = vmatpush1.msra.mxu0 0.0
  %816 = vmatprep.subr.mxu0 0.0
  %817 = vmatpush1.msra.mxu0 0.0
  %818 = vmatprep.subr.mxu0 0.0
  %819 = vmatpush1.msra.mxu0 0.0
  %820 = vmatprep.subr.mxu0 0.0
  %821 = vmatpush1.msra.mxu0 0.0
  %822 = vmatprep.subr.mxu0 0.0
  %823 = vmatpush1.msra.mxu0 0.0
  %824 = vmatprep.subr.mxu0 0.0
  %825 = vmatpush1.msra.mxu0 0.0
  %826 = vmatprep.subr.mxu0 0.0
  %827 = vmatpush1.msra.mxu0 0.0
  %828 = vmatprep.subr.mxu0 0.0
  %829 = vmatpush1.msra.mxu0 0.0
  %830 = vmatprep.subr.mxu0 0.0
  %831 = vmatpush1.msra.mxu0 0.0
  %832 = vmatprep.subr.mxu0 0.0
  %833 = vmatpush1.msra.mxu0 0.0
  %834 = vmatprep.subr.mxu0 0.0
  %835 = vmatpush1.msra.mxu0 0.0
  %836 = vmatprep.subr.mxu0 0.0
  %837 = vmatpush1.msra.mxu0 0.0
  %838 = vmatprep.subr.mxu0 0.0
  %839 = vmatpush1.msra.mxu0 0.0
  %840 = vmatprep.subr.mxu0 0.0
  %841 = vmatpush1.msra.mxu0 0.0
  %842 = vmatprep.subr.mxu0 0.0
  %843 = vmatpush1.msra.mxu0 0.0
  %844 = vmatprep.subr.mxu0 0.0
  %845 = vmatpush1.msra.mxu0 0.0
  %846 = vmatprep.subr.mxu0 0.0
  %847 = vmatpush1.msra.mxu0 0.0
  %848 = vmatprep.mubr.f32.mxu0 0.0
  %849 = vmatmul.mubr.f32.gmra.mrb[0].mxu0 %v782
  %v850 = vpop.f32.mrb[0].mxu0
  %v851 = vadd.f32 %v779, %v850
  %v852 = vpop.f32.mrb[0].mxu0
  %v853 = vadd.f32 %v780, %v852
  %854 = vdwg.mxu0
  %v855 = vxor.u32 %v851, 2147483648
  %v856 = vxor.u32 %v853, 2147483648
  %v857 = vmul.f32 %v855, 1.442695
  %v858 = vpow.pop %v857
  %v859 = vmul.f32 %v856, 1.442695
  %v860 = vpow.pop %v859
  %v861 = vadd.f32 %v858, 1.0
  %v862 = vadd.f32 %v860, 1.0
  %v863 = vrcp.pop %v861
  %v864 = vmul.f32 1.0, %v863
  %v865 = vrcp.pop %v862
  %v866 = vmul.f32 1.0, %v865
  %v867 = vtanh.pop %v853
  %v868 = vmul.f32 %v864, %v772
  %870 = vrot.lane.b32.xlu0 %v867, 64
  %v871 = vpop.permute.xlu0 %870
  %v873 = vmul.f32 %v864, %v871
  %875 = vrot.lane.b32.xlu0 %v873, 64
  %v876 = vpop.permute.xlu0 %875
  %v878 = vadd.f32 %v868, %v876
  %v879 = vtanh.pop %v878
  %881 = vrot.lane.b32.xlu0 %v879, 64
  %v882 = vpop.permute.xlu0 %881
  %v884 = vmul.f32 %v866, %v882
  %v885 = vld [vmem:[#allocation2 + $0x70] sm:$0xff]
  %v886 = vld [vmem:[#allocation2 + $0x78] sm:$0xff]
  %v888 = vsel %vm246, %v884, 0
  %890 = vmatprep.subr.mxu0 %v207
  %891 = vmatpush1.msra.mxu0 %v206
  %892 = vmatprep.subr.mxu0 %v209
  %893 = vmatpush1.msra.mxu0 %v208
  %894 = vmatprep.subr.mxu0 %v211
  %895 = vmatpush1.msra.mxu0 %v210
  %896 = vmatprep.subr.mxu0 %v213
  %897 = vmatpush1.msra.mxu0 %v212
  %898 = vmatprep.subr.mxu0 %v215
  %899 = vmatpush1.msra.mxu0 %v214
  %900 = vmatprep.subr.mxu0 %v217
  %901 = vmatpush1.msra.mxu0 %v216
  %902 = vmatprep.subr.mxu0 %v219
  %903 = vmatpush1.msra.mxu0 %v218
  %904 = vmatprep.subr.mxu0 %v221
  %905 = vmatpush1.msra.mxu0 %v220
  %906 = vmatprep.subr.mxu0 0.0
  %907 = vmatpush1.msra.mxu0 0.0
  %908 = vmatprep.subr.mxu0 0.0
  %909 = vmatpush1.msra.mxu0 0.0
  %910 = vmatprep.subr.mxu0 0.0
  %911 = vmatpush1.msra.mxu0 0.0
  %912 = vmatprep.subr.mxu0 0.0
  %913 = vmatpush1.msra.mxu0 0.0
  %914 = vmatprep.subr.mxu0 0.0
  %915 = vmatpush1.msra.mxu0 0.0
  %916 = vmatprep.subr.mxu0 0.0
  %917 = vmatpush1.msra.mxu0 0.0
  %918 = vmatprep.subr.mxu0 0.0
  %919 = vmatpush1.msra.mxu0 0.0
  %920 = vmatprep.subr.mxu0 0.0
  %921 = vmatpush1.msra.mxu0 0.0
  %922 = vmatprep.subr.mxu0 0.0
  %923 = vmatpush1.msra.mxu0 0.0
  %924 = vmatprep.subr.mxu0 0.0
  %925 = vmatpush1.msra.mxu0 0.0
  %926 = vmatprep.subr.mxu0 0.0
  %927 = vmatpush1.msra.mxu0 0.0
  %928 = vmatprep.subr.mxu0 0.0
  %929 = vmatpush1.msra.mxu0 0.0
  %930 = vmatprep.subr.mxu0 0.0
  %931 = vmatpush1.msra.mxu0 0.0
  %932 = vmatprep.subr.mxu0 0.0
  %933 = vmatpush1.msra.mxu0 0.0
  %934 = vmatprep.subr.mxu0 0.0
  %935 = vmatpush1.msra.mxu0 0.0
  %936 = vmatprep.subr.mxu0 0.0
  %937 = vmatpush1.msra.mxu0 0.0
  %938 = vmatprep.subr.mxu0 0.0
  %939 = vmatpush1.msra.mxu0 0.0
  %940 = vmatprep.subr.mxu0 0.0
  %941 = vmatpush1.msra.mxu0 0.0
  %942 = vmatprep.subr.mxu0 0.0
  %943 = vmatpush1.msra.mxu0 0.0
  %944 = vmatprep.subr.mxu0 0.0
  %945 = vmatpush1.msra.mxu0 0.0
  %946 = vmatprep.subr.mxu0 0.0
  %947 = vmatpush1.msra.mxu0 0.0
  %948 = vmatprep.subr.mxu0 0.0
  %949 = vmatpush1.msra.mxu0 0.0
  %950 = vmatprep.subr.mxu0 0.0
  %951 = vmatpush1.msra.mxu0 0.0
  %952 = vmatprep.subr.mxu0 0.0
  %953 = vmatpush1.msra.mxu0 0.0
  %954 = vmatprep.mubr.f32.mxu0 0.0
  %955 = vmatmul.mubr.f32.gmra.mrb[0].mxu0 %v888
  %v956 = vpop.f32.mrb[0].mxu0
  %v957 = vadd.f32 %v885, %v956
  %v958 = vpop.f32.mrb[0].mxu0
  %v959 = vadd.f32 %v886, %v958
  %960 = vdwg.mxu0
  %v961 = vxor.u32 %v957, 2147483648
  %v962 = vxor.u32 %v959, 2147483648
  %v963 = vmul.f32 %v961, 1.442695
  %v964 = vpow.pop %v963
  %v965 = vmul.f32 %v962, 1.442695
  %v966 = vpow.pop %v965
  %v967 = vadd.f32 %v964, 1.0
  %v968 = vadd.f32 %v966, 1.0
  %v969 = vrcp.pop %v967
  %v970 = vmul.f32 1.0, %v969
  %v971 = vrcp.pop %v968
  %v972 = vmul.f32 1.0, %v971
  %v973 = vtanh.pop %v959
  %v974 = vmul.f32 %v970, %v878
  %976 = vrot.lane.b32.xlu0 %v973, 64
  %v977 = vpop.permute.xlu0 %976
  %v979 = vmul.f32 %v970, %v977
  %981 = vrot.lane.b32.xlu0 %v979, 64
  %v982 = vpop.permute.xlu0 %981
  %v984 = vadd.f32 %v974, %v982
  %v985 = vtanh.pop %v984
  %987 = vrot.lane.b32.xlu0 %v985, 64
  %v988 = vpop.permute.xlu0 %987
  %v990 = vmul.f32 %v972, %v988
  %v991 = vld [vmem:[%s4 + $0x30] sm:$0xff]
  %v992 = vld [vmem:[%s4 + $0x38] sm:$0xff]
  %v993 = vld [vmem:[%s4 + $0x40] sm:$0xff]
  %v994 = vld [vmem:[%s4 + $0x48] sm:$0xff]
  %v995 = vld [vmem:[%s4 + $0x50] sm:$0xff]
  %v996 = vld [vmem:[%s4 + $0x58] sm:$0xff]
  %v997 = vld [vmem:[%s4 + $0x60] sm:$0xff]
  %v998 = vld [vmem:[%s4 + $0x68] sm:$0xff]
  %v999 = vld [vmem:[%s4 + $0x70] sm:$0xff]
  %v1000 = vld [vmem:[%s4 + $0x78] sm:$0xff]
  %v1001 = vld [vmem:[%s4 + $0x80] sm:$0xff]
  %v1002 = vld [vmem:[%s4 + $0x88] sm:$0xff]
  %v1003 = vld [vmem:[%s4 + $0x90] sm:$0xff]
  %v1004 = vld [vmem:[%s4 + $0x98] sm:$0xff]
  %v1005 = vld [vmem:[%s4 + $0xa0] sm:$0xff]
  %v1006 = vld [vmem:[%s4 + $0xa8] sm:$0xff]
  %v1007 = vld [vmem:[%s4 + $0xb0] sm:$0x1]
  %v1008 = vsel %vm246, %v990, %v984
  %v1009 = vlaneseq
  %v1010 = vshrl.u32 %v1009, 7
  %v1011 = vsub.s32 0, %v1010
  %v1012 = vrot.slane %v1007, %v1011
  %1013 = vmatprep.subr.mxu0 0.0
  %1014 = vmatpush1.msra.mxu0 %v991
  %1015 = vmatprep.subr.mxu0 0.0
  %1016 = vmatpush1.msra.mxu0 %v992
  %1017 = vmatprep.subr.mxu0 0.0
  %1018 = vmatpush1.msra.mxu0 %v993
  %1019 = vmatprep.subr.mxu0 0.0
  %1020 = vmatpush1.msra.mxu0 %v994
  %1021 = vmatprep.subr.mxu0 0.0
  %1022 = vmatpush1.msra.mxu0 %v995
  %1023 = vmatprep.subr.mxu0 0.0
  %1024 = vmatpush1.msra.mxu0 %v996
  %1025 = vmatprep.subr.mxu0 0.0
  %1026 = vmatpush1.msra.mxu0 %v997
  %1027 = vmatprep.subr.mxu0 0.0
  %1028 = vmatpush1.msra.mxu0 %v998
  %1029 = vmatprep.subr.mxu0 0.0
  %1030 = vmatpush1.msra.mxu0 %v999
  %1031 = vmatprep.subr.mxu0 0.0
  %1032 = vmatpush1.msra.mxu0 %v1000
  %1033 = vmatprep.subr.mxu0 0.0
  %1034 = vmatpush1.msra.mxu0 %v1001
  %1035 = vmatprep.subr.mxu0 0.0
  %1036 = vmatpush1.msra.mxu0 %v1002
  %1037 = vmatprep.subr.mxu0 0.0
  %1038 = vmatpush1.msra.mxu0 %v1003
  %1039 = vmatprep.subr.mxu0 0.0
  %1040 = vmatpush1.msra.mxu0 %v1004
  %1041 = vmatprep.subr.mxu0 0.0
  %1042 = vmatpush1.msra.mxu0 %v1005
  %1043 = vmatprep.subr.mxu0 0.0
  %1044 = vmatpush1.msra.mxu0 %v1006
  %1045 = vmatprep.subr.mxu0 0.0
  %1046 = vmatpush1.msra.mxu0 0.0
  %1047 = vmatprep.subr.mxu0 0.0
  %1048 = vmatpush1.msra.mxu0 0.0
  %1049 = vmatprep.subr.mxu0 0.0
  %1050 = vmatpush1.msra.mxu0 0.0
  %1051 = vmatprep.subr.mxu0 0.0
  %1052 = vmatpush1.msra.mxu0 0.0
  %1053 = vmatprep.subr.mxu0 0.0
  %1054 = vmatpush1.msra.mxu0 0.0
  %1055 = vmatprep.subr.mxu0 0.0
  %1056 = vmatpush1.msra.mxu0 0.0
  %1057 = vmatprep.subr.mxu0 0.0
  %1058 = vmatpush1.msra.mxu0 0.0
  %1059 = vmatprep.subr.mxu0 0.0
  %1060 = vmatpush1.msra.mxu0 0.0
  %1061 = vmatprep.subr.mxu0 0.0
  %1062 = vmatpush1.msra.mxu0 0.0
  %1063 = vmatprep.subr.mxu0 0.0
  %1064 = vmatpush1.msra.mxu0 0.0
  %1065 = vmatprep.subr.mxu0 0.0
  %1066 = vmatpush1.msra.mxu0 0.0
  %1067 = vmatprep.subr.mxu0 0.0
  %1068 = vmatpush1.msra.mxu0 0.0
  %1069 = vmatprep.subr.mxu0 0.0
  %1070 = vmatpush1.msra.mxu0 0.0
  %1071 = vmatprep.subr.mxu0 0.0
  %1072 = vmatpush1.msra.mxu0 0.0
  %1073 = vmatprep.subr.mxu0 0.0
  %1074 = vmatpush1.msra.mxu0 0.0
  %1075 = vmatprep.subr.mxu0 0.0
  %1076 = vmatpush1.msra.mxu0 0.0
  %1077 = vmatprep.mubr.f32.mxu0 0.0
  %1078 = vmatmul.mubr.f32.gmra.mrb[0].mxu0 %v1008
  %v1079 = vpop.f32.mrb[0].mxu0
  %v1080 = vadd.f32 %v1012, %v1079
  %v1081 = vpop.f32.mrb[0].mxu0
  %1082 = vdwg.mxu0
  %v1083 = vtanh.pop %v1080
  %v1084 = vld [vmem:[%s4] sm:$0xf]
  %v1085 = vld [vmem:[%s4 + $0x28] sm:$0x1]
  %v1086 = vld [vmem:[%s1] sm:$0xff]
  %v1087 = vld [vmem:[%s1 + $0x8] sm:$0xff]
  %v1088 = vld [vmem:[%s1 + $0x10] sm:$0xff]
  %v1089 = vld [vmem:[%s1 + $0x18] sm:$0xff]
  %v1090 = vld [vmem:[%s1 + $0x20] sm:$0xff]
  %v1091 = vld [vmem:[%s1 + $0x28] sm:$0xff]
  %v1092 = vlaneseq
  %v1093 = vshrl.u32 %v1092, 7
  %v1094 = vsub.s32 0, %v1093
  %v1095 = vrot.slane %v1085, %v1094
  %vm1096 = vcmask 31744
  %v1098 = vsel %vm1096, %v1086, 0
  %v1101 = vsel %vm1096, %v1087, 0
  %v1104 = vsel %vm1096, %v1088, 0
  %v1107 = vsel %vm1096, %v1089, 0
  %v1110 = vsel %vm1096, %v1090, 0
  %v1113 = vsel %vm1096, %v1091, 0
  %vm1115 = vcmask 1043456
  %v1117 = vsel %vm1115, %v1084, 0
  %1119 = vmatprep.subr.mxu0 0.0
  %1120 = vmatpush1.msra.mxu0 %v1117
  %1121 = vmatprep.subr.mxu0 0.0
  %1122 = vmatpush1.msra.mxu0 0.0
  %1123 = vmatprep.subr.mxu0 0.0
  %1124 = vmatpush1.msra.mxu0 0.0
  %1125 = vmatprep.subr.mxu0 0.0
  %1126 = vmatpush1.msra.mxu0 0.0
  %1127 = vmatprep.subr.mxu0 0.0
  %1128 = vmatpush1.msra.mxu0 0.0
  %1129 = vmatprep.subr.mxu0 0.0
  %1130 = vmatpush1.msra.mxu0 0.0
  %1131 = vmatprep.subr.mxu0 0.0
  %1132 = vmatpush1.msra.mxu0 0.0
  %1133 = vmatprep.subr.mxu0 0.0
  %1134 = vmatpush1.msra.mxu0 0.0
  %1135 = vmatprep.subr.mxu0 0.0
  %1136 = vmatpush1.msra.mxu0 0.0
  %1137 = vmatprep.subr.mxu0 0.0
  %1138 = vmatpush1.msra.mxu0 0.0
  %1139 = vmatprep.subr.mxu0 0.0
  %1140 = vmatpush1.msra.mxu0 0.0
  %1141 = vmatprep.subr.mxu0 0.0
  %1142 = vmatpush1.msra.mxu0 0.0
  %1143 = vmatprep.subr.mxu0 0.0
  %1144 = vmatpush1.msra.mxu0 0.0
  %1145 = vmatprep.subr.mxu0 0.0
  %1146 = vmatpush1.msra.mxu0 0.0
  %1147 = vmatprep.subr.mxu0 0.0
  %1148 = vmatpush1.msra.mxu0 0.0
  %1149 = vmatprep.subr.mxu0 0.0
  %1150 = vmatpush1.msra.mxu0 0.0
  %1151 = vmatprep.subr.mxu0 0.0
  %1152 = vmatpush1.msra.mxu0 0.0
  %1153 = vmatprep.subr.mxu0 0.0
  %1154 = vmatpush1.msra.mxu0 0.0
  %1155 = vmatprep.subr.mxu0 0.0
  %1156 = vmatpush1.msra.mxu0 0.0
  %1157 = vmatprep.subr.mxu0 0.0
  %1158 = vmatpush1.msra.mxu0 0.0
  %1159 = vmatprep.subr.mxu0 0.0
  %1160 = vmatpush1.msra.mxu0 0.0
  %1161 = vmatprep.subr.mxu0 0.0
  %1162 = vmatpush1.msra.mxu0 0.0
  %1163 = vmatprep.subr.mxu0 0.0
  %1164 = vmatpush1.msra.mxu0 0.0
  %1165 = vmatprep.subr.mxu0 0.0
  %1166 = vmatpush1.msra.mxu0 0.0
  %1167 = vmatprep.subr.mxu0 0.0
  %1168 = vmatpush1.msra.mxu0 0.0
  %1169 = vmatprep.subr.mxu0 0.0
  %1170 = vmatpush1.msra.mxu0 0.0
  %1171 = vmatprep.subr.mxu0 0.0
  %1172 = vmatpush1.msra.mxu0 0.0
  %1173 = vmatprep.subr.mxu0 0.0
  %1174 = vmatpush1.msra.mxu0 0.0
  %1175 = vmatprep.subr.mxu0 0.0
  %1176 = vmatpush1.msra.mxu0 0.0
  %1177 = vmatprep.subr.mxu0 0.0
  %1178 = vmatpush1.msra.mxu0 0.0
  %1179 = vmatprep.subr.mxu0 0.0
  %1180 = vmatpush1.msra.mxu0 0.0
  %1181 = vmatprep.subr.mxu0 0.0
  %1182 = vmatpush1.msra.mxu0 0.0
  %1183 = vmatprep.mubr.f32.mxu0 0.0
  %1184 = vmatmul.mubr.f32.gmra.mrb[0].mxu0 %v1098
  %v1185 = vpop.f32.mrb[0].mxu0
  %v1186 = vadd.f32 %v1095, %v1185
  %v1187 = vpop.f32.mrb[0].mxu0
  %1188 = vmatprep.mubr.f32.mxu0 0.0
  %1189 = vmatmul.mubr.f32.gmra.mrb[0].mxu0 %v1101
  %v1190 = vpop.f32.mrb[0].mxu0
  %v1191 = vadd.f32 %v1095, %v1190
  %v1192 = vpop.f32.mrb[0].mxu0
  %1193 = vmatprep.mubr.f32.mxu0 0.0
  %1194 = vmatmul.mubr.f32.gmra.mrb[0].mxu0 %v1104
  %v1195 = vpop.f32.mrb[0].mxu0
  %v1196 = vadd.f32 %v1095, %v1195
  %v1197 = vpop.f32.mrb[0].mxu0
  %1198 = vmatprep.mubr.f32.mxu0 0.0
  %1199 = vmatmul.mubr.f32.gmra.mrb[0].mxu0 %v1107
  %v1200 = vpop.f32.mrb[0].mxu0
  %v1201 = vadd.f32 %v1095, %v1200
  %v1202 = vpop.f32.mrb[0].mxu0
  %1203 = vmatprep.mubr.f32.mxu0 0.0
  %1204 = vmatmul.mubr.f32.gmra.mrb[0].mxu0 %v1110
  %v1205 = vpop.f32.mrb[0].mxu0
  %v1206 = vadd.f32 %v1095, %v1205
  %v1207 = vpop.f32.mrb[0].mxu0
  %1208 = vmatprep.mubr.f32.mxu0 0.0
  %1209 = vmatmul.mubr.f32.gmra.mrb[0].mxu0 %v1113
  %v1210 = vpop.f32.mrb[0].mxu0
  %v1211 = vadd.f32 %v1095, %v1210
  %v1212 = vpop.f32.mrb[0].mxu0
  %1213 = vdwg.mxu0
  %1214 = vst [vmem:[#allocation3] sm:$0xff] %v1186
  %1215 = vst [vmem:[#allocation3 + $0x8] sm:$0xff] %v1191
  %1216 = vst [vmem:[#allocation3 + $0x10] sm:$0xff] %v1196
  %1217 = vst [vmem:[#allocation3 + $0x18] sm:$0xff] %v1201
  %1218 = vst [vmem:[#allocation3 + $0x20] sm:$0xff] %v1206
  %1219 = vst [vmem:[#allocation3 + $0x28] sm:$0xff] %v1211
  %v1220 = vld [vmem:[%s4 + $0x8] sm:$0xff]
  %v1221 = vld [vmem:[%s4 + $0x10] sm:$0xff]
  %v1222 = vld [vmem:[%s4 + $0x18] sm:$0xff]
  %v1223 = vld [vmem:[%s4 + $0x20] sm:$0xff]
  %v1224 = vld [vmem:[%s2] sm:$0xff]
  %v1225 = vmul.f32 %v1224, 6.0
  %v1226 = vcvt.f32.s32.to.zero.pseudo %v1225
  %vm1227 = vcmp.gt.s32.totalorder %v1226, 0
  %v1228 = vsel %vm1227, %v1226, 0
  %vm1229 = vcmp.lt.s32.totalorder %v1228, 5
  %v1230 = vsel %vm1229, %v1228, 5
  %v1231 = vld [vmem:[#allocation3] sm:$0xff]
  %vm1232 = vcmask 261120
  %v1234 = vsel %vm1232, %v1083, 0
  %1236 = vmatprep.subr.mxu0 0.0
  %1237 = vmatpush1.msra.mxu0 %v1220
  %1238 = vmatprep.subr.mxu0 0.0
  %1239 = vmatpush1.msra.mxu0 %v1221
  %1240 = vmatprep.subr.mxu0 0.0
  %1241 = vmatpush1.msra.mxu0 %v1222
  %1242 = vmatprep.subr.mxu0 0.0
  %1243 = vmatpush1.msra.mxu0 %v1223
  %1244 = vmatprep.subr.mxu0 0.0
  %1245 = vmatpush1.msra.mxu0 0.0
  %1246 = vmatprep.subr.mxu0 0.0
  %1247 = vmatpush1.msra.mxu0 0.0
  %1248 = vmatprep.subr.mxu0 0.0
  %1249 = vmatpush1.msra.mxu0 0.0
  %1250 = vmatprep.subr.mxu0 0.0
  %1251 = vmatpush1.msra.mxu0 0.0
  %1252 = vmatprep.subr.mxu0 0.0
  %1253 = vmatpush1.msra.mxu0 0.0
  %1254 = vmatprep.subr.mxu0 0.0
  %1255 = vmatpush1.msra.mxu0 0.0
  %1256 = vmatprep.subr.mxu0 0.0
  %1257 = vmatpush1.msra.mxu0 0.0
  %1258 = vmatprep.subr.mxu0 0.0
  %1259 = vmatpush1.msra.mxu0 0.0
  %1260 = vmatprep.subr.mxu0 0.0
  %1261 = vmatpush1.msra.mxu0 0.0
  %1262 = vmatprep.subr.mxu0 0.0
  %1263 = vmatpush1.msra.mxu0 0.0
  %1264 = vmatprep.subr.mxu0 0.0
  %1265 = vmatpush1.msra.mxu0 0.0
  %1266 = vmatprep.subr.mxu0 0.0
  %1267 = vmatpush1.msra.mxu0 0.0
  %1268 = vmatprep.subr.mxu0 0.0
  %1269 = vmatpush1.msra.mxu0 0.0
  %1270 = vmatprep.subr.mxu0 0.0
  %1271 = vmatpush1.msra.mxu0 0.0
  %1272 = vmatprep.subr.mxu0 0.0
  %1273 = vmatpush1.msra.mxu0 0.0
  %1274 = vmatprep.subr.mxu0 0.0
  %1275 = vmatpush1.msra.mxu0 0.0
  %1276 = vmatprep.subr.mxu0 0.0
  %1277 = vmatpush1.msra.mxu0 0.0
  %1278 = vmatprep.subr.mxu0 0.0
  %1279 = vmatpush1.msra.mxu0 0.0
  %1280 = vmatprep.subr.mxu0 0.0
  %1281 = vmatpush1.msra.mxu0 0.0
  %1282 = vmatprep.subr.mxu0 0.0
  %1283 = vmatpush1.msra.mxu0 0.0
  %1284 = vmatprep.subr.mxu0 0.0
  %1285 = vmatpush1.msra.mxu0 0.0
  %1286 = vmatprep.subr.mxu0 0.0
  %1287 = vmatpush1.msra.mxu0 0.0
  %1288 = vmatprep.subr.mxu0 0.0
  %1289 = vmatpush1.msra.mxu0 0.0
  %1290 = vmatprep.subr.mxu0 0.0
  %1291 = vmatpush1.msra.mxu0 0.0
  %1292 = vmatprep.subr.mxu0 0.0
  %1293 = vmatpush1.msra.mxu0 0.0
  %1294 = vmatprep.subr.mxu0 0.0
  %1295 = vmatpush1.msra.mxu0 0.0
  %1296 = vmatprep.subr.mxu0 0.0
  %1297 = vmatpush1.msra.mxu0 0.0
  %1298 = vmatprep.subr.mxu0 0.0
  %1299 = vmatpush1.msra.mxu0 0.0
  %1300 = vmatprep.mubr.f32.mxu0 0.0
  %1301 = vmatmul.mubr.f32.gmra.mrb[0].mxu0 %v1234
  %v1302 = vpop.f32.mrb[0].mxu0
  %v1303 = vadd.f32 %v1231, %v1302
  %v1304 = vpop.f32.mrb[0].mxu0
  %1305 = vdwg.mxu0
  %v1306 = vxor.u32 %v1303, 2147483648
  %v1307 = vmul.f32 %v1306, 1.442695
  %v1308 = vpow.pop %v1307
  %v1309 = vadd.f32 %v1308, 1.0
  %v1310 = vrcp.pop %v1309
  %v1311 = vmul.f32 1.0, %v1310
  %v1312 = vtanh.pop %v1303
  %v1313 = vmul.f32 %v1311, %v1083
  %1315 = vrot.lane.b32.xlu0 %v1312, 32
  %v1316 = vpop.permute.xlu0 %1315
  %v1318 = vmul.f32 %v1311, %v1316
  %1320 = vrot.lane.b32.xlu0 %v1318, 32
  %v1321 = vpop.permute.xlu0 %1320
  %v1323 = vadd.f32 %v1313, %v1321
  %v1324 = vtanh.pop %v1323
  %1326 = vrot.lane.b32.xlu0 %v1324, 32
  %v1327 = vpop.permute.xlu0 %1326
  %v1329 = vmul.f32 %v1311, %v1327
  %vm1330 = vcmp.eq.s32.totalorder %v1230, 0
  %v1331 = vsel %vm1330, 1, 0
  %1332 = vset.pattern.permute.xlu0 1
  %1333 = vperm.xlu0 %1332, %v1331
  %v1334 = vpop.permute.xlu0 %1333
  %vm1335 = vcmp.eq.s32.totalorder %v1334, 1
  %v1336 = vsel %vm1335, %v1329, 0.0
  %v1337 = vld [vmem:[#allocation3 + $0x8] sm:$0xff]
  %1339 = vrot.lane.b32.xlu0 %v1329, 64
  %v1340 = vpop.permute.xlu0 %1339
  %v1341 = vsel %vm1232, %v1340, 0
  %1343 = vmatprep.subr.mxu0 0.0
  %1344 = vmatpush1.msra.mxu0 %v1220
  %1345 = vmatprep.subr.mxu0 0.0
  %1346 = vmatpush1.msra.mxu0 %v1221
  %1347 = vmatprep.subr.mxu0 0.0
  %1348 = vmatpush1.msra.mxu0 %v1222
  %1349 = vmatprep.subr.mxu0 0.0
  %1350 = vmatpush1.msra.mxu0 %v1223
  %1351 = vmatprep.subr.mxu0 0.0
  %1352 = vmatpush1.msra.mxu0 0.0
  %1353 = vmatprep.subr.mxu0 0.0
  %1354 = vmatpush1.msra.mxu0 0.0
  %1355 = vmatprep.subr.mxu0 0.0
  %1356 = vmatpush1.msra.mxu0 0.0
  %1357 = vmatprep.subr.mxu0 0.0
  %1358 = vmatpush1.msra.mxu0 0.0
  %1359 = vmatprep.subr.mxu0 0.0
  %1360 = vmatpush1.msra.mxu0 0.0
  %1361 = vmatprep.subr.mxu0 0.0
  %1362 = vmatpush1.msra.mxu0 0.0
  %1363 = vmatprep.subr.mxu0 0.0
  %1364 = vmatpush1.msra.mxu0 0.0
  %1365 = vmatprep.subr.mxu0 0.0
  %1366 = vmatpush1.msra.mxu0 0.0
  %1367 = vmatprep.subr.mxu0 0.0
  %1368 = vmatpush1.msra.mxu0 0.0
  %1369 = vmatprep.subr.mxu0 0.0
  %1370 = vmatpush1.msra.mxu0 0.0
  %1371 = vmatprep.subr.mxu0 0.0
  %1372 = vmatpush1.msra.mxu0 0.0
  %1373 = vmatprep.subr.mxu0 0.0
  %1374 = vmatpush1.msra.mxu0 0.0
  %1375 = vmatprep.subr.mxu0 0.0
  %1376 = vmatpush1.msra.mxu0 0.0
  %1377 = vmatprep.subr.mxu0 0.0
  %1378 = vmatpush1.msra.mxu0 0.0
  %1379 = vmatprep.subr.mxu0 0.0
  %1380 = vmatpush1.msra.mxu0 0.0
  %1381 = vmatprep.subr.mxu0 0.0
  %1382 = vmatpush1.msra.mxu0 0.0
  %1383 = vmatprep.subr.mxu0 0.0
  %1384 = vmatpush1.msra.mxu0 0.0
  %1385 = vmatprep.subr.mxu0 0.0
  %1386 = vmatpush1.msra.mxu0 0.0
  %1387 = vmatprep.subr.mxu0 0.0
  %1388 = vmatpush1.msra.mxu0 0.0
  %1389 = vmatprep.subr.mxu0 0.0
  %1390 = vmatpush1.msra.mxu0 0.0
  %1391 = vmatprep.subr.mxu0 0.0
  %1392 = vmatpush1.msra.mxu0 0.0
  %1393 = vmatprep.subr.mxu0 0.0
  %1394 = vmatpush1.msra.mxu0 0.0
  %1395 = vmatprep.subr.mxu0 0.0
  %1396 = vmatpush1.msra.mxu0 0.0
  %1397 = vmatprep.subr.mxu0 0.0
  %1398 = vmatpush1.msra.mxu0 0.0
  %1399 = vmatprep.subr.mxu0 0.0
  %1400 = vmatpush1.msra.mxu0 0.0
  %1401 = vmatprep.subr.mxu0 0.0
  %1402 = vmatpush1.msra.mxu0 0.0
  %1403 = vmatprep.subr.mxu0 0.0
  %1404 = vmatpush1.msra.mxu0 0.0
  %1405 = vmatprep.subr.mxu0 0.0
  %1406 = vmatpush1.msra.mxu0 0.0
  %1407 = vmatprep.mubr.f32.mxu0 0.0
  %1408 = vmatmul.mubr.f32.gmra.mrb[0].mxu0 %v1341
  %v1409 = vpop.f32.mrb[0].mxu0
  %v1410 = vadd.f32 %v1337, %v1409
  %v1411 = vpop.f32.mrb[0].mxu0
  %1412 = vdwg.mxu0
  %v1413 = vxor.u32 %v1410, 2147483648
  %v1414 = vmul.f32 %v1413, 1.442695
  %v1415 = vpow.pop %v1414
  %v1416 = vadd.f32 %v1415, 1.0
  %v1417 = vrcp.pop %v1416
  %v1418 = vmul.f32 1.0, %v1417
  %v1419 = vtanh.pop %v1410
  %v1420 = vmul.f32 %v1418, %v1323
  %1422 = vrot.lane.b32.xlu0 %v1419, 32
  %v1423 = vpop.permute.xlu0 %1422
  %v1425 = vmul.f32 %v1418, %v1423
  %1427 = vrot.lane.b32.xlu0 %v1425, 32
  %v1428 = vpop.permute.xlu0 %1427
  %v1430 = vadd.f32 %v1420, %v1428
  %v1431 = vtanh.pop %v1430
  %1433 = vrot.lane.b32.xlu0 %v1431, 32
  %v1434 = vpop.permute.xlu0 %1433
  %v1436 = vmul.f32 %v1418, %v1434
  %vm1437 = vcmp.eq.s32.totalorder %v1230, 1
  %v1438 = vsel %vm1437, 1, 0
  %1439 = vset.pattern.permute.xlu0 1
  %1440 = vperm.xlu0 %1439, %v1438
  %v1441 = vpop.permute.xlu0 %1440
  %vm1442 = vcmp.eq.s32.totalorder %v1441, 1
  %v1443 = vsel %vm1442, %v1436, %v1336
  %v1444 = vld [vmem:[#allocation3 + $0x10] sm:$0xff]
  %1446 = vrot.lane.b32.xlu0 %v1436, 64
  %v1447 = vpop.permute.xlu0 %1446
  %v1448 = vsel %vm1232, %v1447, 0
  %1450 = vmatprep.subr.mxu0 0.0
  %1451 = vmatpush1.msra.mxu0 %v1220
  %1452 = vmatprep.subr.mxu0 0.0
  %1453 = vmatpush1.msra.mxu0 %v1221
  %1454 = vmatprep.subr.mxu0 0.0
  %1455 = vmatpush1.msra.mxu0 %v1222
  %1456 = vmatprep.subr.mxu0 0.0
  %1457 = vmatpush1.msra.mxu0 %v1223
  %1458 = vmatprep.subr.mxu0 0.0
  %1459 = vmatpush1.msra.mxu0 0.0
  %1460 = vmatprep.subr.mxu0 0.0
  %1461 = vmatpush1.msra.mxu0 0.0
  %1462 = vmatprep.subr.mxu0 0.0
  %1463 = vmatpush1.msra.mxu0 0.0
  %1464 = vmatprep.subr.mxu0 0.0
  %1465 = vmatpush1.msra.mxu0 0.0
  %1466 = vmatprep.subr.mxu0 0.0
  %1467 = vmatpush1.msra.mxu0 0.0
  %1468 = vmatprep.subr.mxu0 0.0
  %1469 = vmatpush1.msra.mxu0 0.0
  %1470 = vmatprep.subr.mxu0 0.0
  %1471 = vmatpush1.msra.mxu0 0.0
  %1472 = vmatprep.subr.mxu0 0.0
  %1473 = vmatpush1.msra.mxu0 0.0
  %1474 = vmatprep.subr.mxu0 0.0
  %1475 = vmatpush1.msra.mxu0 0.0
  %1476 = vmatprep.subr.mxu0 0.0
  %1477 = vmatpush1.msra.mxu0 0.0
  %1478 = vmatprep.subr.mxu0 0.0
  %1479 = vmatpush1.msra.mxu0 0.0
  %1480 = vmatprep.subr.mxu0 0.0
  %1481 = vmatpush1.msra.mxu0 0.0
  %1482 = vmatprep.subr.mxu0 0.0
  %1483 = vmatpush1.msra.mxu0 0.0
  %1484 = vmatprep.subr.mxu0 0.0
  %1485 = vmatpush1.msra.mxu0 0.0
  %1486 = vmatprep.subr.mxu0 0.0
  %1487 = vmatpush1.msra.mxu0 0.0
  %1488 = vmatprep.subr.mxu0 0.0
  %1489 = vmatpush1.msra.mxu0 0.0
  %1490 = vmatprep.subr.mxu0 0.0
  %1491 = vmatpush1.msra.mxu0 0.0
  %1492 = vmatprep.subr.mxu0 0.0
  %1493 = vmatpush1.msra.mxu0 0.0
  %1494 = vmatprep.subr.mxu0 0.0
  %1495 = vmatpush1.msra.mxu0 0.0
  %1496 = vmatprep.subr.mxu0 0.0
  %1497 = vmatpush1.msra.mxu0 0.0
  %1498 = vmatprep.subr.mxu0 0.0
  %1499 = vmatpush1.msra.mxu0 0.0
  %1500 = vmatprep.subr.mxu0 0.0
  %1501 = vmatpush1.msra.mxu0 0.0
  %1502 = vmatprep.subr.mxu0 0.0
  %1503 = vmatpush1.msra.mxu0 0.0
  %1504 = vmatprep.subr.mxu0 0.0
  %1505 = vmatpush1.msra.mxu0 0.0
  %1506 = vmatprep.subr.mxu0 0.0
  %1507 = vmatpush1.msra.mxu0 0.0
  %1508 = vmatprep.subr.mxu0 0.0
  %1509 = vmatpush1.msra.mxu0 0.0
  %1510 = vmatprep.subr.mxu0 0.0
  %1511 = vmatpush1.msra.mxu0 0.0
  %1512 = vmatprep.subr.mxu0 0.0
  %1513 = vmatpush1.msra.mxu0 0.0
  %1514 = vmatprep.mubr.f32.mxu0 0.0
  %1515 = vmatmul.mubr.f32.gmra.mrb[0].mxu0 %v1448
  %v1516 = vpop.f32.mrb[0].mxu0
  %v1517 = vadd.f32 %v1444, %v1516
  %v1518 = vpop.f32.mrb[0].mxu0
  %1519 = vdwg.mxu0
  %v1520 = vxor.u32 %v1517, 2147483648
  %v1521 = vmul.f32 %v1520, 1.442695
  %v1522 = vpow.pop %v1521
  %v1523 = vadd.f32 %v1522, 1.0
  %v1524 = vrcp.pop %v1523
  %v1525 = vmul.f32 1.0, %v1524
  %v1526 = vtanh.pop %v1517
  %v1527 = vmul.f32 %v1525, %v1430
  %1529 = vrot.lane.b32.xlu0 %v1526, 32
  %v1530 = vpop.permute.xlu0 %1529
  %v1532 = vmul.f32 %v1525, %v1530
  %1534 = vrot.lane.b32.xlu0 %v1532, 32
  %v1535 = vpop.permute.xlu0 %1534
  %v1537 = vadd.f32 %v1527, %v1535
  %v1538 = vtanh.pop %v1537
  %1540 = vrot.lane.b32.xlu0 %v1538, 32
  %v1541 = vpop.permute.xlu0 %1540
  %v1543 = vmul.f32 %v1525, %v1541
  %vm1544 = vcmp.eq.s32.totalorder %v1230, 2
  %v1545 = vsel %vm1544, 1, 0
  %1546 = vset.pattern.permute.xlu0 1
  %1547 = vperm.xlu0 %1546, %v1545
  %v1548 = vpop.permute.xlu0 %1547
  %vm1549 = vcmp.eq.s32.totalorder %v1548, 1
  %v1550 = vsel %vm1549, %v1543, %v1443
  %v1551 = vld [vmem:[#allocation3 + $0x18] sm:$0xff]
  %1553 = vrot.lane.b32.xlu0 %v1543, 64
  %v1554 = vpop.permute.xlu0 %1553
  %v1555 = vsel %vm1232, %v1554, 0
  %1557 = vmatprep.subr.mxu0 0.0
  %1558 = vmatpush1.msra.mxu0 %v1220
  %1559 = vmatprep.subr.mxu0 0.0
  %1560 = vmatpush1.msra.mxu0 %v1221
  %1561 = vmatprep.subr.mxu0 0.0
  %1562 = vmatpush1.msra.mxu0 %v1222
  %1563 = vmatprep.subr.mxu0 0.0
  %1564 = vmatpush1.msra.mxu0 %v1223
  %1565 = vmatprep.subr.mxu0 0.0
  %1566 = vmatpush1.msra.mxu0 0.0
  %1567 = vmatprep.subr.mxu0 0.0
  %1568 = vmatpush1.msra.mxu0 0.0
  %1569 = vmatprep.subr.mxu0 0.0
  %1570 = vmatpush1.msra.mxu0 0.0
  %1571 = vmatprep.subr.mxu0 0.0
  %1572 = vmatpush1.msra.mxu0 0.0
  %1573 = vmatprep.subr.mxu0 0.0
  %1574 = vmatpush1.msra.mxu0 0.0
  %1575 = vmatprep.subr.mxu0 0.0
  %1576 = vmatpush1.msra.mxu0 0.0
  %1577 = vmatprep.subr.mxu0 0.0
  %1578 = vmatpush1.msra.mxu0 0.0
  %1579 = vmatprep.subr.mxu0 0.0
  %1580 = vmatpush1.msra.mxu0 0.0
  %1581 = vmatprep.subr.mxu0 0.0
  %1582 = vmatpush1.msra.mxu0 0.0
  %1583 = vmatprep.subr.mxu0 0.0
  %1584 = vmatpush1.msra.mxu0 0.0
  %1585 = vmatprep.subr.mxu0 0.0
  %1586 = vmatpush1.msra.mxu0 0.0
  %1587 = vmatprep.subr.mxu0 0.0
  %1588 = vmatpush1.msra.mxu0 0.0
  %1589 = vmatprep.subr.mxu0 0.0
  %1590 = vmatpush1.msra.mxu0 0.0
  %1591 = vmatprep.subr.mxu0 0.0
  %1592 = vmatpush1.msra.mxu0 0.0
  %1593 = vmatprep.subr.mxu0 0.0
  %1594 = vmatpush1.msra.mxu0 0.0
  %1595 = vmatprep.subr.mxu0 0.0
  %1596 = vmatpush1.msra.mxu0 0.0
  %1597 = vmatprep.subr.mxu0 0.0
  %1598 = vmatpush1.msra.mxu0 0.0
  %1599 = vmatprep.subr.mxu0 0.0
  %1600 = vmatpush1.msra.mxu0 0.0
  %1601 = vmatprep.subr.mxu0 0.0
  %1602 = vmatpush1.msra.mxu0 0.0
  %1603 = vmatprep.subr.mxu0 0.0
  %1604 = vmatpush1.msra.mxu0 0.0
  %1605 = vmatprep.subr.mxu0 0.0
  %1606 = vmatpush1.msra.mxu0 0.0
  %1607 = vmatprep.subr.mxu0 0.0
  %1608 = vmatpush1.msra.mxu0 0.0
  %1609 = vmatprep.subr.mxu0 0.0
  %1610 = vmatpush1.msra.mxu0 0.0
  %1611 = vmatprep.subr.mxu0 0.0
  %1612 = vmatpush1.msra.mxu0 0.0
  %1613 = vmatprep.subr.mxu0 0.0
  %1614 = vmatpush1.msra.mxu0 0.0
  %1615 = vmatprep.subr.mxu0 0.0
  %1616 = vmatpush1.msra.mxu0 0.0
  %1617 = vmatprep.subr.mxu0 0.0
  %1618 = vmatpush1.msra.mxu0 0.0
  %1619 = vmatprep.subr.mxu0 0.0
  %1620 = vmatpush1.msra.mxu0 0.0
  %1621 = vmatprep.mubr.f32.mxu0 0.0
  %1622 = vmatmul.mubr.f32.gmra.mrb[0].mxu0 %v1555
  %v1623 = vpop.f32.mrb[0].mxu0
  %v1624 = vadd.f32 %v1551, %v1623
  %v1625 = vpop.f32.mrb[0].mxu0
  %1626 = vdwg.mxu0
  %v1627 = vxor.u32 %v1624, 2147483648
  %v1628 = vmul.f32 %v1627, 1.442695
  %v1629 = vpow.pop %v1628
  %v1630 = vadd.f32 %v1629, 1.0
  %v1631 = vrcp.pop %v1630
  %v1632 = vmul.f32 1.0, %v1631
  %v1633 = vtanh.pop %v1624
  %v1634 = vmul.f32 %v1632, %v1537
  %1636 = vrot.lane.b32.xlu0 %v1633, 32
  %v1637 = vpop.permute.xlu0 %1636
  %v1639 = vmul.f32 %v1632, %v1637
  %1641 = vrot.lane.b32.xlu0 %v1639, 32
  %v1642 = vpop.permute.xlu0 %1641
  %v1644 = vadd.f32 %v1634, %v1642
  %v1645 = vtanh.pop %v1644
  %1647 = vrot.lane.b32.xlu0 %v1645, 32
  %v1648 = vpop.permute.xlu0 %1647
  %v1650 = vmul.f32 %v1632, %v1648
  %vm1651 = vcmp.eq.s32.totalorder %v1230, 3
  %v1652 = vsel %vm1651, 1, 0
  %1653 = vset.pattern.permute.xlu0 1
  %1654 = vperm.xlu0 %1653, %v1652
  %v1655 = vpop.permute.xlu0 %1654
  %vm1656 = vcmp.eq.s32.totalorder %v1655, 1
  %v1657 = vsel %vm1656, %v1650, %v1550
  %v1658 = vld [vmem:[#allocation3 + $0x20] sm:$0xff]
  %1660 = vrot.lane.b32.xlu0 %v1650, 64
  %v1661 = vpop.permute.xlu0 %1660
  %v1662 = vsel %vm1232, %v1661, 0
  %1664 = vmatprep.subr.mxu0 0.0
  %1665 = vmatpush1.msra.mxu0 %v1220
  %1666 = vmatprep.subr.mxu0 0.0
  %1667 = vmatpush1.msra.mxu0 %v1221
  %1668 = vmatprep.subr.mxu0 0.0
  %1669 = vmatpush1.msra.mxu0 %v1222
  %1670 = vmatprep.subr.mxu0 0.0
  %1671 = vmatpush1.msra.mxu0 %v1223
  %1672 = vmatprep.subr.mxu0 0.0
  %1673 = vmatpush1.msra.mxu0 0.0
  %1674 = vmatprep.subr.mxu0 0.0
  %1675 = vmatpush1.msra.mxu0 0.0
  %1676 = vmatprep.subr.mxu0 0.0
  %1677 = vmatpush1.msra.mxu0 0.0
  %1678 = vmatprep.subr.mxu0 0.0
  %1679 = vmatpush1.msra.mxu0 0.0
  %1680 = vmatprep.subr.mxu0 0.0
  %1681 = vmatpush1.msra.mxu0 0.0
  %1682 = vmatprep.subr.mxu0 0.0
  %1683 = vmatpush1.msra.mxu0 0.0
  %1684 = vmatprep.subr.mxu0 0.0
  %1685 = vmatpush1.msra.mxu0 0.0
  %1686 = vmatprep.subr.mxu0 0.0
  %1687 = vmatpush1.msra.mxu0 0.0
  %1688 = vmatprep.subr.mxu0 0.0
  %1689 = vmatpush1.msra.mxu0 0.0
  %1690 = vmatprep.subr.mxu0 0.0
  %1691 = vmatpush1.msra.mxu0 0.0
  %1692 = vmatprep.subr.mxu0 0.0
  %1693 = vmatpush1.msra.mxu0 0.0
  %1694 = vmatprep.subr.mxu0 0.0
  %1695 = vmatpush1.msra.mxu0 0.0
  %1696 = vmatprep.subr.mxu0 0.0
  %1697 = vmatpush1.msra.mxu0 0.0
  %1698 = vmatprep.subr.mxu0 0.0
  %1699 = vmatpush1.msra.mxu0 0.0
  %1700 = vmatprep.subr.mxu0 0.0
  %1701 = vmatpush1.msra.mxu0 0.0
  %1702 = vmatprep.subr.mxu0 0.0
  %1703 = vmatpush1.msra.mxu0 0.0
  %1704 = vmatprep.subr.mxu0 0.0
  %1705 = vmatpush1.msra.mxu0 0.0
  %1706 = vmatprep.subr.mxu0 0.0
  %1707 = vmatpush1.msra.mxu0 0.0
  %1708 = vmatprep.subr.mxu0 0.0
  %1709 = vmatpush1.msra.mxu0 0.0
  %1710 = vmatprep.subr.mxu0 0.0
  %1711 = vmatpush1.msra.mxu0 0.0
  %1712 = vmatprep.subr.mxu0 0.0
  %1713 = vmatpush1.msra.mxu0 0.0
  %1714 = vmatprep.subr.mxu0 0.0
  %1715 = vmatpush1.msra.mxu0 0.0
  %1716 = vmatprep.subr.mxu0 0.0
  %1717 = vmatpush1.msra.mxu0 0.0
  %1718 = vmatprep.subr.mxu0 0.0
  %1719 = vmatpush1.msra.mxu0 0.0
  %1720 = vmatprep.subr.mxu0 0.0
  %1721 = vmatpush1.msra.mxu0 0.0
  %1722 = vmatprep.subr.mxu0 0.0
  %1723 = vmatpush1.msra.mxu0 0.0
  %1724 = vmatprep.subr.mxu0 0.0
  %1725 = vmatpush1.msra.mxu0 0.0
  %1726 = vmatprep.subr.mxu0 0.0
  %1727 = vmatpush1.msra.mxu0 0.0
  %1728 = vmatprep.mubr.f32.mxu0 0.0
  %1729 = vmatmul.mubr.f32.gmra.mrb[0].mxu0 %v1662
  %v1730 = vpop.f32.mrb[0].mxu0
  %v1731 = vadd.f32 %v1658, %v1730
  %v1732 = vpop.f32.mrb[0].mxu0
  %1733 = vdwg.mxu0
  %v1734 = vxor.u32 %v1731, 2147483648
  %v1735 = vmul.f32 %v1734, 1.442695
  %v1736 = vpow.pop %v1735
  %v1737 = vadd.f32 %v1736, 1.0
  %v1738 = vrcp.pop %v1737
  %v1739 = vmul.f32 1.0, %v1738
  %v1740 = vtanh.pop %v1731
  %v1741 = vmul.f32 %v1739, %v1644
  %1743 = vrot.lane.b32.xlu0 %v1740, 32
  %v1744 = vpop.permute.xlu0 %1743
  %v1746 = vmul.f32 %v1739, %v1744
  %1748 = vrot.lane.b32.xlu0 %v1746, 32
  %v1749 = vpop.permute.xlu0 %1748
  %v1751 = vadd.f32 %v1741, %v1749
  %v1752 = vtanh.pop %v1751
  %1754 = vrot.lane.b32.xlu0 %v1752, 32
  %v1755 = vpop.permute.xlu0 %1754
  %v1757 = vmul.f32 %v1739, %v1755
  %vm1758 = vcmp.eq.s32.totalorder %v1230, 4
  %v1759 = vsel %vm1758, 1, 0
  %1760 = vset.pattern.permute.xlu0 1
  %1761 = vperm.xlu0 %1760, %v1759
  %v1762 = vpop.permute.xlu0 %1761
  %vm1763 = vcmp.eq.s32.totalorder %v1762, 1
  %v1764 = vsel %vm1763, %v1757, %v1657
  %v1765 = vld [vmem:[#allocation3 + $0x28] sm:$0xff]
  %1767 = vrot.lane.b32.xlu0 %v1757, 64
  %v1768 = vpop.permute.xlu0 %1767
  %v1769 = vsel %vm1232, %v1768, 0
  %1771 = vmatprep.subr.mxu0 0.0
  %1772 = vmatpush1.msra.mxu0 %v1220
  %1773 = vmatprep.subr.mxu0 0.0
  %1774 = vmatpush1.msra.mxu0 %v1221
  %1775 = vmatprep.subr.mxu0 0.0
  %1776 = vmatpush1.msra.mxu0 %v1222
  %1777 = vmatprep.subr.mxu0 0.0
  %1778 = vmatpush1.msra.mxu0 %v1223
  %1779 = vmatprep.subr.mxu0 0.0
  %1780 = vmatpush1.msra.mxu0 0.0
  %1781 = vmatprep.subr.mxu0 0.0
  %1782 = vmatpush1.msra.mxu0 0.0
  %1783 = vmatprep.subr.mxu0 0.0
  %1784 = vmatpush1.msra.mxu0 0.0
  %1785 = vmatprep.subr.mxu0 0.0
  %1786 = vmatpush1.msra.mxu0 0.0
  %1787 = vmatprep.subr.mxu0 0.0
  %1788 = vmatpush1.msra.mxu0 0.0
  %1789 = vmatprep.subr.mxu0 0.0
  %1790 = vmatpush1.msra.mxu0 0.0
  %1791 = vmatprep.subr.mxu0 0.0
  %1792 = vmatpush1.msra.mxu0 0.0
  %1793 = vmatprep.subr.mxu0 0.0
  %1794 = vmatpush1.msra.mxu0 0.0
  %1795 = vmatprep.subr.mxu0 0.0
  %1796 = vmatpush1.msra.mxu0 0.0
  %1797 = vmatprep.subr.mxu0 0.0
  %1798 = vmatpush1.msra.mxu0 0.0
  %1799 = vmatprep.subr.mxu0 0.0
  %1800 = vmatpush1.msra.mxu0 0.0
  %1801 = vmatprep.subr.mxu0 0.0
  %1802 = vmatpush1.msra.mxu0 0.0
  %1803 = vmatprep.subr.mxu0 0.0
  %1804 = vmatpush1.msra.mxu0 0.0
  %1805 = vmatprep.subr.mxu0 0.0
  %1806 = vmatpush1.msra.mxu0 0.0
  %1807 = vmatprep.subr.mxu0 0.0
  %1808 = vmatpush1.msra.mxu0 0.0
  %1809 = vmatprep.subr.mxu0 0.0
  %1810 = vmatpush1.msra.mxu0 0.0
  %1811 = vmatprep.subr.mxu0 0.0
  %1812 = vmatpush1.msra.mxu0 0.0
  %1813 = vmatprep.subr.mxu0 0.0
  %1814 = vmatpush1.msra.mxu0 0.0
  %1815 = vmatprep.subr.mxu0 0.0
  %1816 = vmatpush1.msra.mxu0 0.0
  %1817 = vmatprep.subr.mxu0 0.0
  %1818 = vmatpush1.msra.mxu0 0.0
  %1819 = vmatprep.subr.mxu0 0.0
  %1820 = vmatpush1.msra.mxu0 0.0
  %1821 = vmatprep.subr.mxu0 0.0
  %1822 = vmatpush1.msra.mxu0 0.0
  %1823 = vmatprep.subr.mxu0 0.0
  %1824 = vmatpush1.msra.mxu0 0.0
  %1825 = vmatprep.subr.mxu0 0.0
  %1826 = vmatpush1.msra.mxu0 0.0
  %1827 = vmatprep.subr.mxu0 0.0
  %1828 = vmatpush1.msra.mxu0 0.0
  %1829 = vmatprep.subr.mxu0 0.0
  %1830 = vmatpush1.msra.mxu0 0.0
  %1831 = vmatprep.subr.mxu0 0.0
  %1832 = vmatpush1.msra.mxu0 0.0
  %1833 = vmatprep.subr.mxu0 0.0
  %1834 = vmatpush1.msra.mxu0 0.0
  %1835 = vmatprep.mubr.f32.mxu0 0.0
  %1836 = vmatmul.mubr.f32.gmra.mrb[0].mxu0 %v1769
  %v1837 = vpop.f32.mrb[0].mxu0
  %v1838 = vadd.f32 %v1765, %v1837
  %v1839 = vpop.f32.mrb[0].mxu0
  %1840 = vdwg.mxu0
  %v1841 = vxor.u32 %v1838, 2147483648
  %v1842 = vmul.f32 %v1841, 1.442695
  %v1843 = vpow.pop %v1842
  %v1844 = vadd.f32 %v1843, 1.0
  %v1845 = vrcp.pop %v1844
  %v1846 = vmul.f32 1.0, %v1845
  %v1847 = vtanh.pop %v1838
  %v1848 = vmul.f32 %v1846, %v1751
  %1850 = vrot.lane.b32.xlu0 %v1847, 32
  %v1851 = vpop.permute.xlu0 %1850
  %v1853 = vmul.f32 %v1846, %v1851
  %1855 = vrot.lane.b32.xlu0 %v1853, 32
  %v1856 = vpop.permute.xlu0 %1855
  %v1858 = vadd.f32 %v1848, %v1856
  %v1859 = vtanh.pop %v1858
  %1861 = vrot.lane.b32.xlu0 %v1859, 32
  %v1862 = vpop.permute.xlu0 %1861
  %v1864 = vmul.f32 %v1846, %v1862
  %vm1865 = vcmp.eq.s32.totalorder %v1230, 5
  %v1866 = vsel %vm1865, 1, 0
  %1867 = vset.pattern.permute.xlu0 1
  %1868 = vperm.xlu0 %1867, %v1866
  %v1869 = vpop.permute.xlu0 %1868
  %vm1870 = vcmp.eq.s32.totalorder %v1869, 1
  %v1871 = vsel %vm1870, %v1864, %v1764
  %v1872 = vld [vmem:[%s4 + $0xb8] sm:$0xff]
  %v1873 = vld [vmem:[%s4 + $0xc0] sm:$0xff]
  %v1874 = vld [vmem:[%s4 + $0xc8] sm:$0xff]
  %v1875 = vld [vmem:[%s4 + $0xd0] sm:$0xff]
  %v1876 = vld [vmem:[%s4 + $0xd8] sm:$0xff]
  %v1877 = vld [vmem:[%s4 + $0xe0] sm:$0xff]
  %v1878 = vld [vmem:[%s4 + $0xe8] sm:$0xff]
  %v1879 = vld [vmem:[%s4 + $0xf0] sm:$0xff]
  %v1880 = vld [vmem:[%s4 + $0xf8] sm:$0xff]
  %v1881 = vld [vmem:[%s4 + $0x100] sm:$0xff]
  %v1882 = vld [vmem:[%s4 + $0x108] sm:$0xff]
  %v1883 = vld [vmem:[%s4 + $0x110] sm:$0xff]
  %v1884 = vld [vmem:[%s4 + $0x118] sm:$0x7]
  %v1885 = vld [vmem:[%s4 + $0x120] sm:$0x1]
  %v1886 = vld [vmem:[%s4 + $0x128] sm:$0x1]
  %v1887 = vld [vmem:[%s4 + $0x130] sm:$0x1]
  %1889 = vrot.lane.b32.xlu0 %v1224, 96
  %v1890 = vpop.permute.xlu0 %1889
  %v1892 = vsel %vm1232, %v990, %v243
  %v1893 = vsel %vm246, %v1892, %v1871
  %vm1894 = vcmask 785408
  %v1895 = vsel %vm1894, %v1893, %v1890
  %v1896 = vlaneseq
  %v1897 = vshrl.u32 %v1896, 7
  %v1898 = vsub.s32 0, %v1897
  %v1899 = vrot.slane %v1885, %v1898
  %vm1900 = vcmask 809984
  %v1902 = vsel %vm1900, %v1895, 0
  %vm1904 = vcmask 1042432
  %v1906 = vsel %vm1904, %v1884, 0
  %1908 = vmatprep.subr.mxu0 0.0
  %1909 = vmatpush1.msra.mxu0 %v1872
  %1910 = vmatprep.subr.mxu0 0.0
  %1911 = vmatpush1.msra.mxu0 %v1873
  %1912 = vmatprep.subr.mxu0 0.0
  %1913 = vmatpush1.msra.mxu0 %v1874
  %1914 = vmatprep.subr.mxu0 0.0
  %1915 = vmatpush1.msra.mxu0 %v1875
  %1916 = vmatprep.subr.mxu0 0.0
  %1917 = vmatpush1.msra.mxu0 %v1876
  %1918 = vmatprep.subr.mxu0 0.0
  %1919 = vmatpush1.msra.mxu0 %v1877
  %1920 = vmatprep.subr.mxu0 0.0
  %1921 = vmatpush1.msra.mxu0 %v1878
  %1922 = vmatprep.subr.mxu0 0.0
  %1923 = vmatpush1.msra.mxu0 %v1879
  %1924 = vmatprep.subr.mxu0 0.0
  %1925 = vmatpush1.msra.mxu0 %v1880
  %1926 = vmatprep.subr.mxu0 0.0
  %1927 = vmatpush1.msra.mxu0 %v1881
  %1928 = vmatprep.subr.mxu0 0.0
  %1929 = vmatpush1.msra.mxu0 %v1882
  %1930 = vmatprep.subr.mxu0 0.0
  %1931 = vmatpush1.msra.mxu0 %v1883
  %1932 = vmatprep.subr.mxu0 0.0
  %1933 = vmatpush1.msra.mxu0 %v1906
  %1934 = vmatprep.subr.mxu0 0.0
  %1935 = vmatpush1.msra.mxu0 0.0
  %1936 = vmatprep.subr.mxu0 0.0
  %1937 = vmatpush1.msra.mxu0 0.0
  %1938 = vmatprep.subr.mxu0 0.0
  %1939 = vmatpush1.msra.mxu0 0.0
  %1940 = vmatprep.subr.mxu0 0.0
  %1941 = vmatpush1.msra.mxu0 0.0
  %1942 = vmatprep.subr.mxu0 0.0
  %1943 = vmatpush1.msra.mxu0 0.0
  %1944 = vmatprep.subr.mxu0 0.0
  %1945 = vmatpush1.msra.mxu0 0.0
  %1946 = vmatprep.subr.mxu0 0.0
  %1947 = vmatpush1.msra.mxu0 0.0
  %1948 = vmatprep.subr.mxu0 0.0
  %1949 = vmatpush1.msra.mxu0 0.0
  %1950 = vmatprep.subr.mxu0 0.0
  %1951 = vmatpush1.msra.mxu0 0.0
  %1952 = vmatprep.subr.mxu0 0.0
  %1953 = vmatpush1.msra.mxu0 0.0
  %1954 = vmatprep.subr.mxu0 0.0
  %1955 = vmatpush1.msra.mxu0 0.0
  %1956 = vmatprep.subr.mxu0 0.0
  %1957 = vmatpush1.msra.mxu0 0.0
  %1958 = vmatprep.subr.mxu0 0.0
  %1959 = vmatpush1.msra.mxu0 0.0
  %1960 = vmatprep.subr.mxu0 0.0
  %1961 = vmatpush1.msra.mxu0 0.0
  %1962 = vmatprep.subr.mxu0 0.0
  %1963 = vmatpush1.msra.mxu0 0.0
  %1964 = vmatprep.subr.mxu0 0.0
  %1965 = vmatpush1.msra.mxu0 0.0
  %1966 = vmatprep.subr.mxu0 0.0
  %1967 = vmatpush1.msra.mxu0 0.0
  %1968 = vmatprep.subr.mxu0 0.0
  %1969 = vmatpush1.msra.mxu0 0.0
  %1970 = vmatprep.subr.mxu0 0.0
  %1971 = vmatpush1.msra.mxu0 0.0
  %1972 = vmatprep.mubr.f32.mxu0 0.0
  %1973 = vmatmul.mubr.f32.gmra.mrb[0].mxu0 %v1902
  %v1974 = vpop.f32.mrb[0].mxu0
  %v1975 = vadd.f32 %v1899, %v1974
  %v1976 = vpop.f32.mrb[0].mxu0
  %1977 = vdwg.mxu0
  %v1978 = vmax.f32 %v1975, 0.0
  %v1979 = vlaneseq
  %v1980 = vshrl.u32 %v1979, 7
  %v1981 = vsub.s32 0, %v1980
  %v1982 = vrot.slane %v1886, %v1981
  %v1983 = vmul.f32 %v1978, %v1982
  %1984 = vadd.xlane.f32.xlu0 %v1983
  %v1985 = vpop.xlane.xlu0 %1984
  %v1986 = vlaneseq
  %v1987 = vshrl.u32 %v1986, 7
  %v1988 = vsub.s32 0, %v1987
  %v1989 = vrot.slane %v1887, %v1988
  %v1990 = vadd.f32 %v1985, %v1989
  %vm1991 = vcmask 7168
  %1992 = vst.msk [vmem:[%s5] sm:$0xff] %vm1991, %v1990
  // Predicated region
  $region22: #{network_forward.1} parent=0 // pred_check
    _
  $region23: #{network_forward.1} parent=0 // pred_check_branch
    %1994 = sbr.rel (0) target = $region25
  $region24: #{network_forward.1} parent=0 // pred_region
    _
  $region25: #{network_forward.1} parent=0 // pred_fallthru
    _
  // Predicated region
  $region26: #{network_forward.1} parent=0 // pred_check
    _
  $region27: #{network_forward.1} parent=0 // pred_check_branch
    %1996 = sbr.rel (0) target = $region29
  $region28: #{network_forward.1} parent=0 // pred_region
    _
  $region29: #{network_forward.1} parent=0 // pred_fallthru
    _

</llo_original>
